<compile_context>
chip_gen: v7x
topology: tpu7x:2x2x1
jax: 0.10.0
libtpu: 0.0.40
codegen_flags: <defaults>
</compile_context>

<pallas_src>
import functools
import math

import jax
import jax.numpy as jnp
from jax import lax
from jax.experimental import pallas as pl
from jax.experimental.pallas import tpu as pltpu

LAYERS = [2] + [20] * 6 + [1]     # 7 linear layers
DTYPE = jnp.float32
MAX_TM = 8192                     # production batch-tile cap (review: 4-8K)
DEFAULT_CHUNK = 512               # lanes per inner-loop chunk


def mlp_kernel(x_ref, p_ref, out_ref, *, dims, chunk, unroll, bf16_matmul):
    """Fused 7-layer MLP on one (in_dim, TM) feature-major batch tile.

    x_ref:   (in_dim, TM)                     batch on the lane axis
    p_ref:   (n_layers, max_out, max_in + 1)  packed weights; bias in last col
    out_ref: (out_dim, TM)
    """
    n_layers = len(dims) - 1
    bias_col = p_ref.shape[-1] - 1
    n_chunks = x_ref.shape[-1] // chunk
    mm_dtype = jnp.bfloat16 if bf16_matmul else jnp.float32

    # ---- Hoist loop-invariant weight loads and bias broadcasts out of the
    # chunk loop (they would otherwise be replayed every unrolled chunk). ----
    ws = []   # weights in torch (out, in) layout
    bs = []   # biases pre-broadcast to (out, chunk)
    for l in range(n_layers):
        w = p_ref[l, : dims[l + 1], : dims[l]]
        b = p_ref[l, : dims[l + 1], bias_col:bias_col + 1]
        ws.append(w if l == 0 else w.astype(mm_dtype))
        bs.append(jnp.broadcast_to(b, (dims[l + 1], chunk)))
    # Layer 0 (fan_in=2) runs on the VPU: pre-broadcast its two weight columns.
    w0c0 = jnp.broadcast_to(ws[0][:, 0:1], (dims[1], chunk))
    w0c1 = jnp.broadcast_to(ws[0][:, 1:2], (dims[1], chunk))

    def body(c, carry):
        start = pl.multiple_of(c * chunk, chunk)
        x = x_ref[:, pl.ds(start, chunk)]                        # (2, chunk)

        # Layer 0 (fan_in=2): two VPU FMAs; K=2 MXU matmul would be ~empty.
        x0 = jnp.broadcast_to(x[0:1, :], (dims[1], chunk))
        x1 = jnp.broadcast_to(x[1:2, :], (dims[1], chunk))
        h = jnp.tanh(w0c0 * x0 + w0c1 * x1 + bs[0])

        # Hidden layers 1..n-2: 20x20 matmuls (MXU) + tanh (EUP), lane-dense.
        for l in range(1, n_layers - 1):
            h = jnp.tanh(
                jnp.dot(ws[l], h.astype(mm_dtype),
                        preferred_element_type=jnp.float32) + bs[l])

        # Final layer: linear, no activation.
        l = n_layers - 1
        y = jnp.dot(ws[l], h.astype(mm_dtype),
                    preferred_element_type=jnp.float32) + bs[l]
        out_ref[:, pl.ds(start, chunk)] = y.astype(out_ref.dtype)
        return carry

    lax.fori_loop(0, n_chunks, body, None, unroll=unroll)


def init_params(key, layers, dtype=DTYPE):
    """PyTorch-Linear-style init: U(-1/sqrt(fan_in), +1/sqrt(fan_in)).

    Weights are (out, in) (torch layout); biases are (out, 1)."""
    params = []
    for i in range(len(layers) - 1):
        fan_in, fan_out = layers[i], layers[i + 1]
        key, kw, kb = jax.random.split(key, 3)
        bound = 1.0 / math.sqrt(fan_in)
        w = jax.random.uniform(kw, (fan_out, fan_in), dtype, -bound, bound)
        b = jax.random.uniform(kb, (fan_out, 1), dtype, -bound, bound)
        params.append((w, b))
    return params


def pack_params(params, dtype=DTYPE):
    """Pack all (W, b) pairs into one (n_layers, max_out, max_in + 1) array.

    W_l lives at [l, :out_l, :in_l]; b_l at [l, :out_l, -1:]."""
    n = len(params)
    max_out = max(w.shape[0] for w, _ in params)
    max_in = max(w.shape[1] for w, _ in params)
    packed = jnp.zeros((n, max_out, max_in + 1), dtype)
    for l, (w, b) in enumerate(params):
        o, i = w.shape
        packed = packed.at[l, :o, :i].set(w.astype(dtype))
        packed = packed.at[l, :o, max_in:].set(b.astype(dtype))
    return packed


def _pick_tm(n, chunk, max_tm=MAX_TM):
    """Choose the batch tile: as large as possible (amortize the ~0.35us/step
    grid overhead, cap at MAX_TM) while giving an EVEN grid of >= 2 steps so
    v7x's two TensorCores are both loaded under 'parallel' semantics."""
    steps = max(2, pl.cdiv(n, max_tm))
    if steps % 2:
        steps += 1
    tm = pl.cdiv(pl.cdiv(n, steps), chunk) * chunk
    return max(chunk, min(tm, max_tm))


@functools.partial(jax.jit, static_argnames=("tm", "chunk", "bf16_matmul"))
def _dnn_forward(x, packed_params, *, tm, chunk, bf16_matmul):
    N, in_dim = x.shape
    out_dim = LAYERS[-1]
    assert in_dim == LAYERS[0]
    assert chunk % 128 == 0 and tm % chunk == 0

    n_pad = pl.cdiv(N, tm) * tm
    # Feature-major layout: batch on the lane axis, zero-pad to the tile.
    # TODO(synk): producing x feature-major upstream would remove this
    # XLA-side transpose+pad copy (extra HBM traffic outside the kernel).
    x_t = jnp.pad(x.T.astype(DTYPE), ((0, 0), (0, n_pad - N)))

    n_chunks = tm // chunk
    kernel = functools.partial(
        mlp_kernel, dims=tuple(LAYERS), chunk=chunk,
        unroll=min(4, n_chunks), bf16_matmul=bf16_matmul)

    out_t = pl.pallas_call(
        kernel,
        out_shape=jax.ShapeDtypeStruct((out_dim, n_pad), DTYPE),
        grid_spec=pltpu.PrefetchScalarGridSpec(
            num_scalar_prefetch=0,
            grid=(n_pad // tm,),
            in_specs=[
                pl.BlockSpec((in_dim, tm), lambda i: (0, i)),
                # whole packed-param array, same block every grid step
                pl.BlockSpec(packed_params.shape, lambda i: (0, 0, 0)),
            ],
            out_specs=pl.BlockSpec((out_dim, tm), lambda i: (0, i)),
        ),
        compiler_params=pltpu.CompilerParams(
            dimension_semantics=("parallel",),  # shards batch across TCs (v7x)
        ),
    )(x_t, packed_params)

    return out_t[:, :N].T                                        # (N, 1)


def dnn_forward(x, packed_params, *, tm=None, chunk=DEFAULT_CHUNK,
                bf16_matmul=False):
    """x: (N, 2) float32 (any N).  Returns (N, 1) float32."""
    if tm is None:
        tm = _pick_tm(x.shape[0], chunk)
    return _dnn_forward(x, packed_params, tm=tm, chunk=chunk,
                        bf16_matmul=bf16_matmul)


def dnn_forward_ref(x, params):
    """Pure-JAX reference mirroring the torch forward (y = x @ W^T + b)."""
    h = x
    for i, (w, b) in enumerate(params):
        h = h @ w.T + b[:, 0]
        if i < len(params) - 1:
            h = jnp.tanh(h)
    return h


if __name__ == "__main__":
    key = jax.random.PRNGKey(0)
    key_x, key_p = jax.random.split(key)

    # Small batch of 2-D collocation points (lb=-1, ub=+1); N deliberately
    # NOT a multiple of the tile to exercise the cdiv/padding path.  The
    # adaptive tm picker gives tm=512 -> a 2-step 'parallel' grid here.
    N = 1000
    x = jax.random.uniform(key_x, (N, LAYERS[0]), DTYPE, -1.0, 1.0)

    params = init_params(key_p, LAYERS)
    packed = pack_params(params)

    out = dnn_forward(x, packed)
    out = jax.block_until_ready(out)

    ref = dnn_forward_ref(x, params)
    assert out.shape == (N, LAYERS[-1]), out.shape
    err = float(jnp.max(jnp.abs(out - ref)))
    assert err < 1e-4, err
    print("KERNEL_OK")
</pallas_src>

<mosaic_0001>
module attributes {stable_mosaic.version = 11 : i64} {
  func.func @mlp_kernel(%arg0: i32, %arg1: memref<2x512xf32, #tpu.memory_space<vmem>>, %arg2: memref<7x20x21xf32, #tpu.memory_space<vmem>>, %arg3: memref<1x512xf32, #tpu.memory_space<vmem>>) attributes {dimension_semantics = [#tpu.dimension_semantics<parallel>], iteration_bounds = array<i64: 2>, scalar_prefetch = 0 : i64, scratch_operands = 0 : i64, tpu.core_type = #tpu.core_type<tc>, window_params = [{transform_indices = @transform_0, window_bounds = array<i64: 2, 512>}, {pipeline_mode = #tpu.pipeline_mode<synchronous>, transform_indices = @transform_1, window_bounds = array<i64: 7, 20, 21>}, {transform_indices = @transform_2, window_bounds = array<i64: 1, 512>}]} {
    %c0 = arith.constant 0 : index
    %c0_0 = arith.constant 0 : index
    %c0_1 = arith.constant 0 : index
    %0 = vector.load %arg2[%c0, %c0_0, %c0_1] : memref<7x20x21xf32, #tpu.memory_space<vmem>>, vector<1x20x2xf32>
    %1 = vector.shape_cast %0 : vector<1x20x2xf32> to vector<20x2xf32>
    %c0_2 = arith.constant 0 : index
    %c0_3 = arith.constant 0 : index
    %c20 = arith.constant 20 : index
    %2 = vector.load %arg2[%c0_2, %c0_3, %c20] : memref<7x20x21xf32, #tpu.memory_space<vmem>>, vector<1x20x1xf32>
    %3 = vector.shape_cast %2 : vector<1x20x1xf32> to vector<20x1xf32>
    %4 = vector.shape_cast %3 : vector<20x1xf32> to vector<20x1xf32>
    %5 = vector.broadcast %4 : vector<20x1xf32> to vector<20x512xf32>
    %c1 = arith.constant 1 : index
    %c0_4 = arith.constant 0 : index
    %c0_5 = arith.constant 0 : index
    %6 = vector.load %arg2[%c1, %c0_4, %c0_5] : memref<7x20x21xf32, #tpu.memory_space<vmem>>, vector<1x20x20xf32>
    %7 = vector.shape_cast %6 : vector<1x20x20xf32> to vector<20x20xf32>
    %c1_6 = arith.constant 1 : index
    %c0_7 = arith.constant 0 : index
    %c20_8 = arith.constant 20 : index
    %8 = vector.load %arg2[%c1_6, %c0_7, %c20_8] : memref<7x20x21xf32, #tpu.memory_space<vmem>>, vector<1x20x1xf32>
    %9 = vector.shape_cast %8 : vector<1x20x1xf32> to vector<20x1xf32>
    %10 = vector.shape_cast %9 : vector<20x1xf32> to vector<20x1xf32>
    %11 = vector.broadcast %10 : vector<20x1xf32> to vector<20x512xf32>
    %c2 = arith.constant 2 : index
    %c0_9 = arith.constant 0 : index
    %c0_10 = arith.constant 0 : index
    %12 = vector.load %arg2[%c2, %c0_9, %c0_10] : memref<7x20x21xf32, #tpu.memory_space<vmem>>, vector<1x20x20xf32>
    %13 = vector.shape_cast %12 : vector<1x20x20xf32> to vector<20x20xf32>
    %c2_11 = arith.constant 2 : index
    %c0_12 = arith.constant 0 : index
    %c20_13 = arith.constant 20 : index
    %14 = vector.load %arg2[%c2_11, %c0_12, %c20_13] : memref<7x20x21xf32, #tpu.memory_space<vmem>>, vector<1x20x1xf32>
    %15 = vector.shape_cast %14 : vector<1x20x1xf32> to vector<20x1xf32>
    %16 = vector.shape_cast %15 : vector<20x1xf32> to vector<20x1xf32>
    %17 = vector.broadcast %16 : vector<20x1xf32> to vector<20x512xf32>
    %c3 = arith.constant 3 : index
    %c0_14 = arith.constant 0 : index
    %c0_15 = arith.constant 0 : index
    %18 = vector.load %arg2[%c3, %c0_14, %c0_15] : memref<7x20x21xf32, #tpu.memory_space<vmem>>, vector<1x20x20xf32>
    %19 = vector.shape_cast %18 : vector<1x20x20xf32> to vector<20x20xf32>
    %c3_16 = arith.constant 3 : index
    %c0_17 = arith.constant 0 : index
    %c20_18 = arith.constant 20 : index
    %20 = vector.load %arg2[%c3_16, %c0_17, %c20_18] : memref<7x20x21xf32, #tpu.memory_space<vmem>>, vector<1x20x1xf32>
    %21 = vector.shape_cast %20 : vector<1x20x1xf32> to vector<20x1xf32>
    %22 = vector.shape_cast %21 : vector<20x1xf32> to vector<20x1xf32>
    %23 = vector.broadcast %22 : vector<20x1xf32> to vector<20x512xf32>
    %c4 = arith.constant 4 : index
    %c0_19 = arith.constant 0 : index
    %c0_20 = arith.constant 0 : index
    %24 = vector.load %arg2[%c4, %c0_19, %c0_20] : memref<7x20x21xf32, #tpu.memory_space<vmem>>, vector<1x20x20xf32>
    %25 = vector.shape_cast %24 : vector<1x20x20xf32> to vector<20x20xf32>
    %c4_21 = arith.constant 4 : index
    %c0_22 = arith.constant 0 : index
    %c20_23 = arith.constant 20 : index
    %26 = vector.load %arg2[%c4_21, %c0_22, %c20_23] : memref<7x20x21xf32, #tpu.memory_space<vmem>>, vector<1x20x1xf32>
    %27 = vector.shape_cast %26 : vector<1x20x1xf32> to vector<20x1xf32>
    %28 = vector.shape_cast %27 : vector<20x1xf32> to vector<20x1xf32>
    %29 = vector.broadcast %28 : vector<20x1xf32> to vector<20x512xf32>
    %c5 = arith.constant 5 : index
    %c0_24 = arith.constant 0 : index
    %c0_25 = arith.constant 0 : index
    %30 = vector.load %arg2[%c5, %c0_24, %c0_25] : memref<7x20x21xf32, #tpu.memory_space<vmem>>, vector<1x20x20xf32>
    %31 = vector.shape_cast %30 : vector<1x20x20xf32> to vector<20x20xf32>
    %c5_26 = arith.constant 5 : index
    %c0_27 = arith.constant 0 : index
    %c20_28 = arith.constant 20 : index
    %32 = vector.load %arg2[%c5_26, %c0_27, %c20_28] : memref<7x20x21xf32, #tpu.memory_space<vmem>>, vector<1x20x1xf32>
    %33 = vector.shape_cast %32 : vector<1x20x1xf32> to vector<20x1xf32>
    %34 = vector.shape_cast %33 : vector<20x1xf32> to vector<20x1xf32>
    %35 = vector.broadcast %34 : vector<20x1xf32> to vector<20x512xf32>
    %c6 = arith.constant 6 : index
    %c0_29 = arith.constant 0 : index
    %c0_30 = arith.constant 0 : index
    %36 = vector.load %arg2[%c6, %c0_29, %c0_30] : memref<7x20x21xf32, #tpu.memory_space<vmem>>, vector<1x1x20xf32>
    %37 = vector.shape_cast %36 : vector<1x1x20xf32> to vector<1x20xf32>
    %c6_31 = arith.constant 6 : index
    %c0_32 = arith.constant 0 : index
    %c20_33 = arith.constant 20 : index
    %38 = vector.load %arg2[%c6_31, %c0_32, %c20_33] : memref<7x20x21xf32, #tpu.memory_space<vmem>>, vector<1x1x1xf32>
    %39 = vector.shape_cast %38 : vector<1x1x1xf32> to vector<1x1xf32>
    %40 = vector.shape_cast %39 : vector<1x1xf32> to vector<1x1xf32>
    %41 = vector.broadcast %40 : vector<1x1xf32> to vector<1x512xf32>
    %42 = vector.extract_strided_slice %1 {offsets = [0, 0], sizes = [20, 1], strides = [1, 1]} : vector<20x2xf32> to vector<20x1xf32>
    %43 = vector.shape_cast %42 : vector<20x1xf32> to vector<20x1xf32>
    %44 = vector.broadcast %43 : vector<20x1xf32> to vector<20x512xf32>
    %45 = vector.extract_strided_slice %1 {offsets = [0, 1], sizes = [20, 1], strides = [1, 1]} : vector<20x2xf32> to vector<20x1xf32>
    %46 = vector.shape_cast %45 : vector<20x1xf32> to vector<20x1xf32>
    %47 = vector.broadcast %46 : vector<20x1xf32> to vector<20x512xf32>
    %c0_i32 = arith.constant 0 : i32
    %c512_i32 = arith.constant 512 : i32
    %48 = arith.muli %c0_i32, %c512_i32 : i32
    %49 = tpu.assume_multiple %48, 512 : i32
    %c0_34 = arith.constant 0 : index
    %50 = arith.index_cast %49 : i32 to index
    %51 = vector.load %arg1[%c0_34, %50] : memref<2x512xf32, #tpu.memory_space<vmem>>, vector<2x512xf32>
    %52 = vector.extract_strided_slice %51 {offsets = [0, 0], sizes = [1, 512], strides = [1, 1]} : vector<2x512xf32> to vector<1x512xf32>
    %53 = vector.shape_cast %52 : vector<1x512xf32> to vector<1x512xf32>
    %54 = vector.broadcast %53 : vector<1x512xf32> to vector<20x512xf32>
    %55 = vector.extract_strided_slice %51 {offsets = [1, 0], sizes = [1, 512], strides = [1, 1]} : vector<2x512xf32> to vector<1x512xf32>
    %56 = vector.shape_cast %55 : vector<1x512xf32> to vector<1x512xf32>
    %57 = vector.broadcast %56 : vector<1x512xf32> to vector<20x512xf32>
    %58 = arith.mulf %44, %54 : vector<20x512xf32>
    %59 = arith.mulf %47, %57 : vector<20x512xf32>
    %60 = arith.addf %58, %59 : vector<20x512xf32>
    %61 = arith.addf %60, %5 : vector<20x512xf32>
    %62 = math.tanh %61 : vector<20x512xf32>
    %cst = arith.constant dense<0.000000e+00> : vector<20x512xf32>
    %63 = tpu.matmul %7, %62, %cst {dimension_numbers = #tpu.dot_dimension_numbers<[1], [0], [0], [1], [0, 0, 1, 1], [], []>} : vector<20x20xf32>, vector<20x512xf32>, vector<20x512xf32> -> vector<20x512xf32>
    %64 = arith.addf %63, %11 : vector<20x512xf32>
    %65 = math.tanh %64 : vector<20x512xf32>
    %cst_35 = arith.constant dense<0.000000e+00> : vector<20x512xf32>
    %66 = tpu.matmul %13, %65, %cst_35 {dimension_numbers = #tpu.dot_dimension_numbers<[1], [0], [0], [1], [0, 0, 1, 1], [], []>} : vector<20x20xf32>, vector<20x512xf32>, vector<20x512xf32> -> vector<20x512xf32>
    %67 = arith.addf %66, %17 : vector<20x512xf32>
    %68 = math.tanh %67 : vector<20x512xf32>
    %cst_36 = arith.constant dense<0.000000e+00> : vector<20x512xf32>
    %69 = tpu.matmul %19, %68, %cst_36 {dimension_numbers = #tpu.dot_dimension_numbers<[1], [0], [0], [1], [0, 0, 1, 1], [], []>} : vector<20x20xf32>, vector<20x512xf32>, vector<20x512xf32> -> vector<20x512xf32>
    %70 = arith.addf %69, %23 : vector<20x512xf32>
    %71 = math.tanh %70 : vector<20x512xf32>
    %cst_37 = arith.constant dense<0.000000e+00> : vector<20x512xf32>
    %72 = tpu.matmul %25, %71, %cst_37 {dimension_numbers = #tpu.dot_dimension_numbers<[1], [0], [0], [1], [0, 0, 1, 1], [], []>} : vector<20x20xf32>, vector<20x512xf32>, vector<20x512xf32> -> vector<20x512xf32>
    %73 = arith.addf %72, %29 : vector<20x512xf32>
    %74 = math.tanh %73 : vector<20x512xf32>
    %cst_38 = arith.constant dense<0.000000e+00> : vector<20x512xf32>
    %75 = tpu.matmul %31, %74, %cst_38 {dimension_numbers = #tpu.dot_dimension_numbers<[1], [0], [0], [1], [0, 0, 1, 1], [], []>} : vector<20x20xf32>, vector<20x512xf32>, vector<20x512xf32> -> vector<20x512xf32>
    %76 = arith.addf %75, %35 : vector<20x512xf32>
    %77 = math.tanh %76 : vector<20x512xf32>
    %cst_39 = arith.constant dense<0.000000e+00> : vector<1x512xf32>
    %78 = tpu.matmul %37, %77, %cst_39 {dimension_numbers = #tpu.dot_dimension_numbers<[1], [0], [0], [1], [0, 0, 1, 1], [], []>} : vector<1x20xf32>, vector<20x512xf32>, vector<1x512xf32> -> vector<1x512xf32>
    %79 = arith.addf %78, %41 : vector<1x512xf32>
    %c0_40 = arith.constant 0 : index
    %80 = arith.index_cast %49 : i32 to index
    %81 = vector.load %arg3[%c0_40, %80] : memref<1x512xf32, #tpu.memory_space<vmem>>, vector<1x512xf32>
    tpu.vector_store %arg3[%c0_40, %80], %79 {strides = array<i32>} : memref<1x512xf32, #tpu.memory_space<vmem>>, vector<1x512xf32>,
    %c1_i32 = arith.constant 1 : i32
    return
  }
  func.func @transform_0(%arg0: i32) -> (i32, i32) {
    %c0_i32 = arith.constant 0 : i32
    %c0_i32_0 = arith.constant 0 : i32
    return %c0_i32, %arg0 : i32, i32
  }
  func.func @transform_1(%arg0: i32) -> (i32, i32, i32) {
    %c0_i32 = arith.constant 0 : i32
    %c0_i32_0 = arith.constant 0 : i32
    %c0_i32_1 = arith.constant 0 : i32
    %c0_i32_2 = arith.constant 0 : i32
    return %c0_i32, %c0_i32_0, %c0_i32_1 : i32, i32, i32
  }
  func.func @transform_2(%arg0: i32) -> (i32, i32) {
    %c0_i32 = arith.constant 0 : i32
    %c0_i32_0 = arith.constant 0 : i32
    return %c0_i32, %arg0 : i32, i32
  }
}

</mosaic_0001>

<llo_original>
// kernel: _dnn_forward.1
$region0: #{_dnn_forward.1}
  #allocation0 [shape = 'u32[]', space=smem, size = 0x4, offset = 0x4, fixed_abs, tag = 'smem constant byte address 0x4 - core index']
  #allocation1 [shape = 'u32[144,128]{1,0:T(1,128)}', space=vmem, size = 0x12000, scoped, tag = 'internal scratch']
  %s0 = inlined_call_operand.vmem [shape: f32[2,1024], index: 0, kind: input, shape index: {}]
  %s1 = inlined_call_operand.vmem [shape: f32[7,20,21], index: 1, kind: input, shape index: {}]
  %s2 = inlined_call_operand.vmem [shape: f32[1,1024], index: 2, kind: output, shape index: {}]
  %s3 = sld [smem:[#allocation0]]
  $region41: #{_dnn_forward.1} parent=0
    _
  %s5 = ssub.s32 1, %s3
  %s6 = scalar_select 0, %s5, %s3
  loop: start=0, step=1, limit=4
  $region2: #{_dnn_forward.1} parent=0 // loop_pre_header
    _
  $region3: #{_dnn_forward.1} parent=0 // loop_header
    %s8 = sphi 0, %s12
    %p9 = scmp.ge.s32.totalorder %s8, 4
    %s18 = sphi 0, %s20
    %s21 = sphi 0, %s18
    %s22 = sphi 0, %s21
    %s38 = sphi 0, %s22
    %s42 = sphi 0, %s42
    %s44 = sphi 0, %s42
    %s45 = sphi 0, %s44
    %s59 = sphi 0, %s45
    %s65 = sphi 0, %s67
    %s68 = sphi 0, %s65
    %s69 = sphi 0, %s68
    %s85 = sphi 0, %s69
  $region4: #{_dnn_forward.1} parent=0 // loop_header_branch
    %11 = sbr.rel (%p9) target = $region8
  $region5: #{_dnn_forward.1} parent=0 // loop_body
    %s13 = ssub.s32 %s8, 1
    %s14 = ssub.s32 %s8, 2
    %s15 = sadd.s32 %s8, 1
    %s16 = ssub.s32 %s8, %s15
    %p17 = scmp.eq.s32.totalorder %s16, 0
    %s19 = sadd.s32 %s18, 1
    %s20 = scalar_select %p17, %s18, %s19
    %p23 = pneg %p17
    %p24 = scmp.eq.s32.totalorder %s8, 1
    %p25 = por %p23, %p24
    %p26 = scmp.ne.s32.totalorder %s18, %s21
    %p27 = scmp.eq.s32.totalorder %s8, 0
    %p28 = por %p26, %p27
    %p29 = scmp.ne.s32.totalorder %s18, %s21
    %p30 = scmp.eq.s32.totalorder %s13, 1
    %p31 = por %p29, %p30
    %p32 = scmp.ne.s32.totalorder %s21, %s22
    %p33 = scmp.eq.s32.totalorder %s13, 0
    %p34 = por %p32, %p33
    %p35 = scmp.ne.s32.totalorder %s21, %s22
    %p36 = scmp.eq.s32.totalorder %s14, 1
    %p37 = por %p35, %p36
    %p39 = scmp.ne.s32.totalorder %s22, %s38
    %p40 = scmp.eq.s32.totalorder %s14, 0
    %p41 = por %p39, %p40
    %s43 = sadd.s32 %s42, 1
    %p46 = scmp.eq.s32.totalorder %s8, 1
    %p47 = scmp.ne.s32.totalorder %s42, %s44
    %p48 = scmp.eq.s32.totalorder %s8, 0
    %p49 = por %p47, %p48
    %p50 = scmp.ne.s32.totalorder %s42, %s44
    %p51 = scmp.eq.s32.totalorder %s13, 1
    %p52 = por %p50, %p51
    %p53 = scmp.ne.s32.totalorder %s44, %s45
    %p54 = scmp.eq.s32.totalorder %s13, 0
    %p55 = por %p53, %p54
    %p56 = scmp.ne.s32.totalorder %s44, %s45
    %p57 = scmp.eq.s32.totalorder %s14, 1
    %p58 = por %p56, %p57
    %p60 = scmp.ne.s32.totalorder %s45, %s59
    %p61 = scmp.eq.s32.totalorder %s14, 0
    %p62 = por %p60, %p61
    %s63 = ssub.s32 %s8, %s15
    %p64 = scmp.eq.s32.totalorder %s63, 0
    %s66 = sadd.s32 %s65, 1
    %s67 = scalar_select %p64, %s65, %s66
    %p70 = pneg %p64
    %p71 = scmp.eq.s32.totalorder %s8, 1
    %p72 = por %p70, %p71
    %p73 = scmp.ne.s32.totalorder %s65, %s68
    %p74 = scmp.eq.s32.totalorder %s8, 0
    %p75 = por %p73, %p74
    %p76 = scmp.ne.s32.totalorder %s65, %s68
    %p77 = scmp.eq.s32.totalorder %s13, 1
    %p78 = por %p76, %p77
    %p79 = scmp.ne.s32.totalorder %s68, %s69
    %p80 = scmp.eq.s32.totalorder %s13, 0
    %p81 = por %p79, %p80
    %p82 = scmp.ne.s32.totalorder %s68, %s69
    %p83 = scmp.eq.s32.totalorder %s14, 1
    %p84 = por %p82, %p83
    %p86 = scmp.ne.s32.totalorder %s69, %s85
    %p87 = scmp.eq.s32.totalorder %s14, 0
    %p88 = por %p86, %p87
    %p89 = scmp.le.s32.totalorder 1, %s8
    %p90 = scmp.lt.s32.totalorder %s8, 3
    %p91 = pnand %p89, %p90
    %p92 = pneg %p91
    // Predicated region
    $region9: #{_dnn_forward.1} parent=5 // pred_check
      _
    $region10: #{_dnn_forward.1} parent=5 // pred_check_branch
      %94 = sbr.rel (%p91) target = $region12
    $region11: #{_dnn_forward.1} parent=5 // pred_region
      %s95 = ssub.s32 %s8, 1
      // Predicated region
      $region13: #{_dnn_forward.1} parent=11 // pred_check
        %p96 = pneg %p55
      $region14: #{_dnn_forward.1} parent=11 // pred_check_branch
        %98 = sbr.rel (%p96) target = $region16
      $region15: #{_dnn_forward.1} parent=11 // pred_region
        _
      $region16: #{_dnn_forward.1} parent=11 // pred_fallthru
        _
    $region12: #{_dnn_forward.1} parent=5 // pred_fallthru
      _
    %p99 = scmp.lt.s32.totalorder %s8, 2
    // Predicated region
    $region17: #{_dnn_forward.1} parent=5 // pred_check
      %p100 = pneg %p99
    $region18: #{_dnn_forward.1} parent=5 // pred_check_branch
      %102 = sbr.rel (%p100) target = $region20
    $region19: #{_dnn_forward.1} parent=5 // pred_region
      // Predicated region
      $region21: #{_dnn_forward.1} parent=19 // pred_check
        %p103 = pneg %p28
      $region22: #{_dnn_forward.1} parent=19 // pred_check_branch
        %105 = sbr.rel (%p103) target = $region24
      $region23: #{_dnn_forward.1} parent=19 // pred_region
        %s106 = smul.u32 4, %s8
        %p107 = scmp.lt.s32.totalorder %s106, 7
        %s108 = scalar_select %p107, %s106, 7
        %s109 = smul.addr %s108, 2
        %s110 = scalar_lea.vmem %s0, %s109
        %s111 = smul.u32 4, %s8
      $region24: #{_dnn_forward.1} parent=19 // pred_fallthru
        _
    $region20: #{_dnn_forward.1} parent=5 // pred_fallthru
      _
    %p112 = scmp.le.s32.totalorder 1, %s8
    %p113 = scmp.lt.s32.totalorder %s8, 3
    %p114 = pnand %p112, %p113
    %p115 = pneg %p114
    // Predicated region
    $region25: #{_dnn_forward.1} parent=5 // pred_check
      _
    $region26: #{_dnn_forward.1} parent=5 // pred_check_branch
      %117 = sbr.rel (%p114) target = $region28
    $region27: #{_dnn_forward.1} parent=5 // pred_region
      %s118 = ssub.s32 %s8, 1
      %s119 = smul.u32 4, %s13
      %p120 = scmp.lt.s32.totalorder %s119, 7
      %s121 = scalar_select %p120, %s119, 7
      %s122 = smul.addr %s121, 2
      %s123 = scalar_lea.vmem %s0, %s122
      %p124 = pneg %p34
      %p125 = pneg %p31
      %p126 = pneg %p55
      %p127 = pneg %p52
      %p128 = pneg %p81
      %p129 = pneg %p78
      %s130 = smul.u32 4, %s13
      %p131 = scmp.lt.s32.totalorder %s130, 7
      %s132 = scalar_select %p131, %s130, 7
      %s133 = scalar_lea.vmem %s2, %s132
      %s134 = smul.u32 4, %s13
      %p135 = scmp.lt.s32.totalorder %s134, 7
      %s136 = scalar_select %p135, %s134, 7
      %s137 = smul.addr %s136, 2
      %s138 = scalar_lea.vmem %s0, %s137
      %s139 = smul.u32 4, %s13
      %s140 = smul.u32 4, %s13
      %p141 = scmp.lt.s32.totalorder %s140, 7
      %s142 = scalar_select %p141, %s140, 7
      %s143 = scalar_lea.vmem %s2, %s142
      %s144 = smul.u32 4, %s13
      %v145 = vld [vmem:[%s1] sm:$0xff]
      %v146 = vld [vmem:[%s1 + $0x8] sm:$0xff]
      %v147 = vld [vmem:[%s1 + $0x10] sm:$0xf]
      %149 = vset.pattern.permute.xlu0 20
      %150 = vperm.xlu0 %149, %v145
      %v151 = vpop.permute.xlu0 %150
      %154 = vset.pattern.permute.xlu0 20
      %155 = vperm.xlu0 %154, %v146
      %v156 = vpop.permute.xlu0 %155
      %159 = vset.pattern.permute.xlu0 20
      %160 = vperm.xlu0 %159, %v147
      %v161 = vpop.permute.xlu0 %160
      %s163 = scalar_lea.vmem %s1, 24
      %v164 = vld [vmem:[%s163] sm:$0xff]
      %v165 = vld [vmem:[%s163 + $0x8] sm:$0xff]
      %v166 = vld [vmem:[%s163 + $0x10] sm:$0xf]
      %168 = vset.pattern.permute.xlu0 20
      %169 = vperm.xlu0 %168, %v164
      %v170 = vpop.permute.xlu0 %169
      %173 = vset.pattern.permute.xlu0 20
      %174 = vperm.xlu0 %173, %v165
      %v175 = vpop.permute.xlu0 %174
      %178 = vset.pattern.permute.xlu0 20
      %179 = vperm.xlu0 %178, %v166
      %v180 = vpop.permute.xlu0 %179
      %s182 = scalar_lea.vmem %s1, 48
      %v183 = vld [vmem:[%s182] sm:$0xff]
      %v184 = vld [vmem:[%s182 + $0x8] sm:$0xff]
      %v185 = vld [vmem:[%s182 + $0x10] sm:$0xf]
      %187 = vset.pattern.permute.xlu0 20
      %188 = vperm.xlu0 %187, %v183
      %v189 = vpop.permute.xlu0 %188
      %192 = vset.pattern.permute.xlu0 20
      %193 = vperm.xlu0 %192, %v184
      %v194 = vpop.permute.xlu0 %193
      %197 = vset.pattern.permute.xlu0 20
      %198 = vperm.xlu0 %197, %v185
      %v199 = vpop.permute.xlu0 %198
      %s201 = scalar_lea.vmem %s1, 72
      %v202 = vld [vmem:[%s201] sm:$0xff]
      %v203 = vld [vmem:[%s201 + $0x8] sm:$0xff]
      %v204 = vld [vmem:[%s201 + $0x10] sm:$0xf]
      %206 = vset.pattern.permute.xlu0 20
      %207 = vperm.xlu0 %206, %v202
      %v208 = vpop.permute.xlu0 %207
      %211 = vset.pattern.permute.xlu0 20
      %212 = vperm.xlu0 %211, %v203
      %v213 = vpop.permute.xlu0 %212
      %216 = vset.pattern.permute.xlu0 20
      %217 = vperm.xlu0 %216, %v204
      %v218 = vpop.permute.xlu0 %217
      %s220 = scalar_lea.vmem %s1, 96
      %v221 = vld [vmem:[%s220] sm:$0xff]
      %v222 = vld [vmem:[%s220 + $0x8] sm:$0xff]
      %v223 = vld [vmem:[%s220 + $0x10] sm:$0xf]
      %225 = vset.pattern.permute.xlu0 20
      %226 = vperm.xlu0 %225, %v221
      %v227 = vpop.permute.xlu0 %226
      %230 = vset.pattern.permute.xlu0 20
      %231 = vperm.xlu0 %230, %v222
      %v232 = vpop.permute.xlu0 %231
      %235 = vset.pattern.permute.xlu0 20
      %236 = vperm.xlu0 %235, %v223
      %v237 = vpop.permute.xlu0 %236
      %s239 = scalar_lea.vmem %s1, 120
      %v240 = vld [vmem:[%s239] sm:$0xff]
      %v241 = vld [vmem:[%s239 + $0x8] sm:$0xff]
      %v242 = vld [vmem:[%s239 + $0x10] sm:$0xf]
      %244 = vset.pattern.permute.xlu0 20
      %245 = vperm.xlu0 %244, %v240
      %v246 = vpop.permute.xlu0 %245
      %249 = vset.pattern.permute.xlu0 20
      %250 = vperm.xlu0 %249, %v241
      %v251 = vpop.permute.xlu0 %250
      %254 = vset.pattern.permute.xlu0 20
      %255 = vperm.xlu0 %254, %v242
      %v256 = vpop.permute.xlu0 %255
      %s258 = scalar_lea.vmem %s1, 144
      %v259 = vld [vmem:[%s258] sm:$0x1]
      %261 = vset.pattern.permute.xlu0 20
      %262 = vperm.xlu0 %261, %v259
      %v263 = vpop.permute.xlu0 %262
      %265 = vset.pattern.permute.xlu0 0
      %266 = vperm.xlu0 %265, %v145
      %v267 = vpop.permute.xlu0 %266
      %269 = vset.pattern.permute.xlu0 0
      %270 = vperm.xlu0 %269, %v146
      %v271 = vpop.permute.xlu0 %270
      %273 = vset.pattern.permute.xlu0 0
      %274 = vperm.xlu0 %273, %v147
      %v275 = vpop.permute.xlu0 %274
      %277 = vset.pattern.permute.xlu0 1
      %278 = vperm.xlu0 %277, %v145
      %v279 = vpop.permute.xlu0 %278
      %281 = vset.pattern.permute.xlu0 1
      %282 = vperm.xlu0 %281, %v146
      %v283 = vpop.permute.xlu0 %282
      %285 = vset.pattern.permute.xlu0 1
      %286 = vperm.xlu0 %285, %v147
      %v287 = vpop.permute.xlu0 %286
      %v289 = vld [vmem:[%s138] sm:$0xff]
      %v291 = vlaneseq
      %v292 = vshrl.u32 %v291, 7
      %v293 = vsub.s32 0, %v292
      %v294 = vrot.slane %v289, %v293
      %v295 = vlaneseq
      %v296 = vshrl.u32 %v295, 7
      %v297 = vsub.s32 2, %v296
      %v298 = vrot.slane %v289, %v297
      %v299 = vlaneseq
      %v300 = vshrl.u32 %v299, 7
      %v301 = vsub.s32 4, %v300
      %v302 = vrot.slane %v289, %v301
      %v303 = vlaneseq
      %v304 = vshrl.u32 %v303, 7
      %v305 = vsub.s32 6, %v304
      %v306 = vrot.slane %v289, %v305
      %v311 = vlaneseq
      %v312 = vshrl.u32 %v311, 7
      %v313 = vsub.s32 0, %v312
      %v314 = vrot.slane %v294, %v313
      %v315 = vlaneseq
      %v316 = vshrl.u32 %v315, 7
      %v317 = vsub.s32 0, %v316
      %v318 = vrot.slane %v298, %v317
      %v319 = vlaneseq
      %v320 = vshrl.u32 %v319, 7
      %v321 = vsub.s32 0, %v320
      %v322 = vrot.slane %v302, %v321
      %v323 = vlaneseq
      %v324 = vshrl.u32 %v323, 7
      %v325 = vsub.s32 0, %v324
      %v326 = vrot.slane %v306, %v325
      %v327 = vlaneseq
      %v328 = vshrl.u32 %v327, 7
      %v329 = vsub.s32 1, %v328
      %v330 = vrot.slane %v289, %v329
      %v331 = vlaneseq
      %v332 = vshrl.u32 %v331, 7
      %v333 = vsub.s32 3, %v332
      %v334 = vrot.slane %v289, %v333
      %v335 = vlaneseq
      %v336 = vshrl.u32 %v335, 7
      %v337 = vsub.s32 5, %v336
      %v338 = vrot.slane %v289, %v337
      %v339 = vlaneseq
      %v340 = vshrl.u32 %v339, 7
      %v341 = vsub.s32 7, %v340
      %v342 = vrot.slane %v289, %v341
      %v347 = vlaneseq
      %v348 = vshrl.u32 %v347, 7
      %v349 = vsub.s32 1, %v348
      %v350 = vrot.slane %v330, %v349
      %v351 = vlaneseq
      %v352 = vshrl.u32 %v351, 7
      %v353 = vsub.s32 1, %v352
      %v354 = vrot.slane %v334, %v353
      %v355 = vlaneseq
      %v356 = vshrl.u32 %v355, 7
      %v357 = vsub.s32 1, %v356
      %v358 = vrot.slane %v338, %v357
      %v359 = vlaneseq
      %v360 = vshrl.u32 %v359, 7
      %v361 = vsub.s32 1, %v360
      %v362 = vrot.slane %v342, %v361
      %v363 = vmul.f32 %v267, %v314
      %v364 = vmul.f32 %v267, %v318
      %v365 = vmul.f32 %v267, %v322
      %v366 = vmul.f32 %v267, %v326
      %v367 = vmul.f32 %v271, %v314
      %v368 = vmul.f32 %v271, %v318
      %v369 = vmul.f32 %v271, %v322
      %v370 = vmul.f32 %v271, %v326
      %v371 = vmul.f32 %v275, %v314
      %v372 = vmul.f32 %v275, %v318
      %v373 = vmul.f32 %v275, %v322
      %v374 = vmul.f32 %v275, %v326
      %v375 = vmul.f32 %v279, %v350
      %v376 = vmul.f32 %v279, %v354
      %v377 = vmul.f32 %v279, %v358
      %v378 = vmul.f32 %v279, %v362
      %v379 = vmul.f32 %v283, %v350
      %v380 = vmul.f32 %v283, %v354
      %v381 = vmul.f32 %v283, %v358
      %v382 = vmul.f32 %v283, %v362
      %v383 = vmul.f32 %v287, %v350
      %v384 = vmul.f32 %v287, %v354
      %v385 = vmul.f32 %v287, %v358
      %v386 = vmul.f32 %v287, %v362
      %v387 = vadd.f32 %v363, %v375
      %v388 = vadd.f32 %v364, %v376
      %v389 = vadd.f32 %v365, %v377
      %v390 = vadd.f32 %v366, %v378
      %v391 = vadd.f32 %v367, %v379
      %v392 = vadd.f32 %v368, %v380
      %v393 = vadd.f32 %v369, %v381
      %v394 = vadd.f32 %v370, %v382
      %v395 = vadd.f32 %v371, %v383
      %v396 = vadd.f32 %v372, %v384
      %v397 = vadd.f32 %v373, %v385
      %v398 = vadd.f32 %v374, %v386
      %v399 = vadd.f32 %v387, %v151
      %v400 = vadd.f32 %v388, %v151
      %v401 = vadd.f32 %v389, %v151
      %v402 = vadd.f32 %v390, %v151
      %v403 = vadd.f32 %v391, %v156
      %v404 = vadd.f32 %v392, %v156
      %v405 = vadd.f32 %v393, %v156
      %v406 = vadd.f32 %v394, %v156
      %v407 = vadd.f32 %v395, %v161
      %v408 = vadd.f32 %v396, %v161
      %v409 = vadd.f32 %v397, %v161
      %v410 = vadd.f32 %v398, %v161
      %v411 = vtanh.pop %v399
      %v412 = vtanh.pop %v400
      %v413 = vtanh.pop %v401
      %v414 = vtanh.pop %v402
      %v415 = vtanh.pop %v403
      %v416 = vtanh.pop %v404
      %v417 = vtanh.pop %v405
      %v418 = vtanh.pop %v406
      %v419 = vtanh.pop %v407
      %v420 = vtanh.pop %v408
      %v421 = vtanh.pop %v409
      %v422 = vtanh.pop %v410
      %vm423 = vcmask 162816
      %v424 = vsel %vm423, %v164, 0
      %v426 = vsel %vm423, %v165, 0
      %v428 = vsel %vm423, %v166, 0
      %vm430 = vcmask 1043456
      %v432 = vsel %vm430, %v419, 0
      %v435 = vsel %vm430, %v420, 0
      %v438 = vsel %vm430, %v421, 0
      %v441 = vsel %vm430, %v422, 0
      %443 = vmatprep.subr.mxu0 %v412
      %444 = vmatpush1.msra.mxu0 %v411
      %445 = vmatprep.subr.mxu0 %v416
      %446 = vmatpush1.msra.mxu0 %v415
      %447 = vmatprep.subr.mxu0 %v435
      %448 = vmatpush1.msra.mxu0 %v432
      %449 = vmatprep.subr.mxu0 0.0
      %450 = vmatpush1.msra.mxu0 0.0
      %451 = vmatprep.subr.mxu0 0.0
      %452 = vmatpush1.msra.mxu0 0.0
      %453 = vmatprep.subr.mxu0 0.0
      %454 = vmatpush1.msra.mxu0 0.0
      %455 = vmatprep.subr.mxu0 0.0
      %456 = vmatpush1.msra.mxu0 0.0
      %457 = vmatprep.subr.mxu0 0.0
      %458 = vmatpush1.msra.mxu0 0.0
      %459 = vmatprep.subr.mxu0 0.0
      %460 = vmatpush1.msra.mxu0 0.0
      %461 = vmatprep.subr.mxu0 0.0
      %462 = vmatpush1.msra.mxu0 0.0
      %463 = vmatprep.subr.mxu0 0.0
      %464 = vmatpush1.msra.mxu0 0.0
      %465 = vmatprep.subr.mxu0 0.0
      %466 = vmatpush1.msra.mxu0 0.0
      %467 = vmatprep.subr.mxu0 0.0
      %468 = vmatpush1.msra.mxu0 0.0
      %469 = vmatprep.subr.mxu0 0.0
      %470 = vmatpush1.msra.mxu0 0.0
      %471 = vmatprep.subr.mxu0 0.0
      %472 = vmatpush1.msra.mxu0 0.0
      %473 = vmatprep.subr.mxu0 0.0
      %474 = vmatpush1.msra.mxu0 0.0
      %475 = vmatprep.subr.mxu0 0.0
      %476 = vmatpush1.msra.mxu0 0.0
      %477 = vmatprep.subr.mxu0 0.0
      %478 = vmatpush1.msra.mxu0 0.0
      %479 = vmatprep.subr.mxu0 0.0
      %480 = vmatpush1.msra.mxu0 0.0
      %481 = vmatprep.subr.mxu0 0.0
      %482 = vmatpush1.msra.mxu0 0.0
      %483 = vmatprep.subr.mxu0 0.0
      %484 = vmatpush1.msra.mxu0 0.0
      %485 = vmatprep.subr.mxu0 0.0
      %486 = vmatpush1.msra.mxu0 0.0
      %487 = vmatprep.subr.mxu0 0.0
      %488 = vmatpush1.msra.mxu0 0.0
      %489 = vmatprep.subr.mxu0 0.0
      %490 = vmatpush1.msra.mxu0 0.0
      %491 = vmatprep.subr.mxu0 0.0
      %492 = vmatpush1.msra.mxu0 0.0
      %493 = vmatprep.subr.mxu0 0.0
      %494 = vmatpush1.msra.mxu0 0.0
      %495 = vmatprep.subr.mxu0 0.0
      %496 = vmatpush1.msra.mxu0 0.0
      %497 = vmatprep.subr.mxu0 0.0
      %498 = vmatpush1.msra.mxu0 0.0
      %499 = vmatprep.subr.mxu0 0.0
      %500 = vmatpush1.msra.mxu0 0.0
      %501 = vmatprep.subr.mxu0 0.0
      %502 = vmatpush1.msra.mxu0 0.0
      %503 = vmatprep.subr.mxu0 0.0
      %504 = vmatpush1.msra.mxu0 0.0
      %505 = vmatprep.subr.mxu0 0.0
      %506 = vmatpush1.msra.mxu0 0.0
      %507 = vmatprep.mubr.f32.mxu0 0.0
      %508 = vmatmul.mubr.f32.gmra.mrb[0].mxu0 %v424
      %v509 = vpop.f32.mrb[0].mxu0
      %v510 = vadd.f32 %v170, %v509
      %v511 = vpop.f32.mrb[0].mxu0
      %v512 = vadd.f32 %v170, %v511
      %513 = vmatprep.mubr.f32.mxu0 0.0
      %514 = vmatmul.mubr.f32.gmra.mrb[0].mxu0 %v426
      %v515 = vpop.f32.mrb[0].mxu0
      %v516 = vadd.f32 %v175, %v515
      %v517 = vpop.f32.mrb[0].mxu0
      %v518 = vadd.f32 %v175, %v517
      %519 = vmatprep.mubr.f32.mxu0 0.0
      %520 = vmatmul.mubr.f32.gmra.mrb[0].mxu0 %v428
      %v521 = vpop.f32.mrb[0].mxu0
      %v522 = vadd.f32 %v180, %v521
      %v523 = vpop.f32.mrb[0].mxu0
      %v524 = vadd.f32 %v180, %v523
      %525 = vdwg.mxu0
      %526 = vmatprep.subr.mxu0 %v414
      %527 = vmatpush1.msra.mxu0 %v413
      %528 = vmatprep.subr.mxu0 %v418
      %529 = vmatpush1.msra.mxu0 %v417
      %530 = vmatprep.subr.mxu0 %v441
      %531 = vmatpush1.msra.mxu0 %v438
      %532 = vmatprep.subr.mxu0 0.0
      %533 = vmatpush1.msra.mxu0 0.0
      %534 = vmatprep.subr.mxu0 0.0
      %535 = vmatpush1.msra.mxu0 0.0
      %536 = vmatprep.subr.mxu0 0.0
      %537 = vmatpush1.msra.mxu0 0.0
      %538 = vmatprep.subr.mxu0 0.0
      %539 = vmatpush1.msra.mxu0 0.0
      %540 = vmatprep.subr.mxu0 0.0
      %541 = vmatpush1.msra.mxu0 0.0
      %542 = vmatprep.subr.mxu0 0.0
      %543 = vmatpush1.msra.mxu0 0.0
      %544 = vmatprep.subr.mxu0 0.0
      %545 = vmatpush1.msra.mxu0 0.0
      %546 = vmatprep.subr.mxu0 0.0
      %547 = vmatpush1.msra.mxu0 0.0
      %548 = vmatprep.subr.mxu0 0.0
      %549 = vmatpush1.msra.mxu0 0.0
      %550 = vmatprep.subr.mxu0 0.0
      %551 = vmatpush1.msra.mxu0 0.0
      %552 = vmatprep.subr.mxu0 0.0
      %553 = vmatpush1.msra.mxu0 0.0
      %554 = vmatprep.subr.mxu0 0.0
      %555 = vmatpush1.msra.mxu0 0.0
      %556 = vmatprep.subr.mxu0 0.0
      %557 = vmatpush1.msra.mxu0 0.0
      %558 = vmatprep.subr.mxu0 0.0
      %559 = vmatpush1.msra.mxu0 0.0
      %560 = vmatprep.subr.mxu0 0.0
      %561 = vmatpush1.msra.mxu0 0.0
      %562 = vmatprep.subr.mxu0 0.0
      %563 = vmatpush1.msra.mxu0 0.0
      %564 = vmatprep.subr.mxu0 0.0
      %565 = vmatpush1.msra.mxu0 0.0
      %566 = vmatprep.subr.mxu0 0.0
      %567 = vmatpush1.msra.mxu0 0.0
      %568 = vmatprep.subr.mxu0 0.0
      %569 = vmatpush1.msra.mxu0 0.0
      %570 = vmatprep.subr.mxu0 0.0
      %571 = vmatpush1.msra.mxu0 0.0
      %572 = vmatprep.subr.mxu0 0.0
      %573 = vmatpush1.msra.mxu0 0.0
      %574 = vmatprep.subr.mxu0 0.0
      %575 = vmatpush1.msra.mxu0 0.0
      %576 = vmatprep.subr.mxu0 0.0
      %577 = vmatpush1.msra.mxu0 0.0
      %578 = vmatprep.subr.mxu0 0.0
      %579 = vmatpush1.msra.mxu0 0.0
      %580 = vmatprep.subr.mxu0 0.0
      %581 = vmatpush1.msra.mxu0 0.0
      %582 = vmatprep.subr.mxu0 0.0
      %583 = vmatpush1.msra.mxu0 0.0
      %584 = vmatprep.subr.mxu0 0.0
      %585 = vmatpush1.msra.mxu0 0.0
      %586 = vmatprep.subr.mxu0 0.0
      %587 = vmatpush1.msra.mxu0 0.0
      %588 = vmatprep.subr.mxu0 0.0
      %589 = vmatpush1.msra.mxu0 0.0
      %590 = vmatprep.mubr.f32.mxu0 0.0
      %591 = vmatmul.mubr.f32.gmra.mrb[0].mxu0 %v424
      %v592 = vpop.f32.mrb[0].mxu0
      %v593 = vadd.f32 %v170, %v592
      %v594 = vpop.f32.mrb[0].mxu0
      %v595 = vadd.f32 %v170, %v594
      %596 = vmatprep.mubr.f32.mxu0 0.0
      %597 = vmatmul.mubr.f32.gmra.mrb[0].mxu0 %v426
      %v598 = vpop.f32.mrb[0].mxu0
      %v599 = vadd.f32 %v175, %v598
      %v600 = vpop.f32.mrb[0].mxu0
      %v601 = vadd.f32 %v175, %v600
      %602 = vmatprep.mubr.f32.mxu0 0.0
      %603 = vmatmul.mubr.f32.gmra.mrb[0].mxu0 %v428
      %v604 = vpop.f32.mrb[0].mxu0
      %v605 = vadd.f32 %v180, %v604
      %v606 = vpop.f32.mrb[0].mxu0
      %v607 = vadd.f32 %v180, %v606
      %608 = vdwg.mxu0
      %v609 = vtanh.pop %v510
      %v610 = vtanh.pop %v512
      %v611 = vtanh.pop %v593
      %v612 = vtanh.pop %v595
      %v613 = vtanh.pop %v516
      %v614 = vtanh.pop %v518
      %v615 = vtanh.pop %v599
      %v616 = vtanh.pop %v601
      %v617 = vtanh.pop %v522
      %v618 = vtanh.pop %v524
      %v619 = vtanh.pop %v605
      %v620 = vtanh.pop %v607
      %v621 = vsel %vm423, %v183, 0
      %v623 = vsel %vm423, %v184, 0
      %v625 = vsel %vm423, %v185, 0
      %v628 = vsel %vm430, %v617, 0
      %v631 = vsel %vm430, %v618, 0
      %v634 = vsel %vm430, %v619, 0
      %v637 = vsel %vm430, %v620, 0
      %639 = vmatprep.subr.mxu0 %v610
      %640 = vmatpush1.msra.mxu0 %v609
      %641 = vmatprep.subr.mxu0 %v614
      %642 = vmatpush1.msra.mxu0 %v613
      %643 = vmatprep.subr.mxu0 %v631
      %644 = vmatpush1.msra.mxu0 %v628
      %645 = vmatprep.subr.mxu0 0.0
      %646 = vmatpush1.msra.mxu0 0.0
      %647 = vmatprep.subr.mxu0 0.0
      %648 = vmatpush1.msra.mxu0 0.0
      %649 = vmatprep.subr.mxu0 0.0
      %650 = vmatpush1.msra.mxu0 0.0
      %651 = vmatprep.subr.mxu0 0.0
      %652 = vmatpush1.msra.mxu0 0.0
      %653 = vmatprep.subr.mxu0 0.0
      %654 = vmatpush1.msra.mxu0 0.0
      %655 = vmatprep.subr.mxu0 0.0
      %656 = vmatpush1.msra.mxu0 0.0
      %657 = vmatprep.subr.mxu0 0.0
      %658 = vmatpush1.msra.mxu0 0.0
      %659 = vmatprep.subr.mxu0 0.0
      %660 = vmatpush1.msra.mxu0 0.0
      %661 = vmatprep.subr.mxu0 0.0
      %662 = vmatpush1.msra.mxu0 0.0
      %663 = vmatprep.subr.mxu0 0.0
      %664 = vmatpush1.msra.mxu0 0.0
      %665 = vmatprep.subr.mxu0 0.0
      %666 = vmatpush1.msra.mxu0 0.0
      %667 = vmatprep.subr.mxu0 0.0
      %668 = vmatpush1.msra.mxu0 0.0
      %669 = vmatprep.subr.mxu0 0.0
      %670 = vmatpush1.msra.mxu0 0.0
      %671 = vmatprep.subr.mxu0 0.0
      %672 = vmatpush1.msra.mxu0 0.0
      %673 = vmatprep.subr.mxu0 0.0
      %674 = vmatpush1.msra.mxu0 0.0
      %675 = vmatprep.subr.mxu0 0.0
      %676 = vmatpush1.msra.mxu0 0.0
      %677 = vmatprep.subr.mxu0 0.0
      %678 = vmatpush1.msra.mxu0 0.0
      %679 = vmatprep.subr.mxu0 0.0
      %680 = vmatpush1.msra.mxu0 0.0
      %681 = vmatprep.subr.mxu0 0.0
      %682 = vmatpush1.msra.mxu0 0.0
      %683 = vmatprep.subr.mxu0 0.0
      %684 = vmatpush1.msra.mxu0 0.0
      %685 = vmatprep.subr.mxu0 0.0
      %686 = vmatpush1.msra.mxu0 0.0
      %687 = vmatprep.subr.mxu0 0.0
      %688 = vmatpush1.msra.mxu0 0.0
      %689 = vmatprep.subr.mxu0 0.0
      %690 = vmatpush1.msra.mxu0 0.0
      %691 = vmatprep.subr.mxu0 0.0
      %692 = vmatpush1.msra.mxu0 0.0
      %693 = vmatprep.subr.mxu0 0.0
      %694 = vmatpush1.msra.mxu0 0.0
      %695 = vmatprep.subr.mxu0 0.0
      %696 = vmatpush1.msra.mxu0 0.0
      %697 = vmatprep.subr.mxu0 0.0
      %698 = vmatpush1.msra.mxu0 0.0
      %699 = vmatprep.subr.mxu0 0.0
      %700 = vmatpush1.msra.mxu0 0.0
      %701 = vmatprep.subr.mxu0 0.0
      %702 = vmatpush1.msra.mxu0 0.0
      %703 = vmatprep.mubr.f32.mxu0 0.0
      %704 = vmatmul.mubr.f32.gmra.mrb[0].mxu0 %v621
      %v705 = vpop.f32.mrb[0].mxu0
      %v706 = vadd.f32 %v189, %v705
      %v707 = vpop.f32.mrb[0].mxu0
      %v708 = vadd.f32 %v189, %v707
      %709 = vmatprep.mubr.f32.mxu0 0.0
      %710 = vmatmul.mubr.f32.gmra.mrb[0].mxu0 %v623
      %v711 = vpop.f32.mrb[0].mxu0
      %v712 = vadd.f32 %v194, %v711
      %v713 = vpop.f32.mrb[0].mxu0
      %v714 = vadd.f32 %v194, %v713
      %715 = vmatprep.mubr.f32.mxu0 0.0
      %716 = vmatmul.mubr.f32.gmra.mrb[0].mxu0 %v625
      %v717 = vpop.f32.mrb[0].mxu0
      %v718 = vadd.f32 %v199, %v717
      %v719 = vpop.f32.mrb[0].mxu0
      %v720 = vadd.f32 %v199, %v719
      %721 = vdwg.mxu0
      %722 = vmatprep.subr.mxu0 %v612
      %723 = vmatpush1.msra.mxu0 %v611
      %724 = vmatprep.subr.mxu0 %v616
      %725 = vmatpush1.msra.mxu0 %v615
      %726 = vmatprep.subr.mxu0 %v637
      %727 = vmatpush1.msra.mxu0 %v634
      %728 = vmatprep.subr.mxu0 0.0
      %729 = vmatpush1.msra.mxu0 0.0
      %730 = vmatprep.subr.mxu0 0.0
      %731 = vmatpush1.msra.mxu0 0.0
      %732 = vmatprep.subr.mxu0 0.0
      %733 = vmatpush1.msra.mxu0 0.0
      %734 = vmatprep.subr.mxu0 0.0
      %735 = vmatpush1.msra.mxu0 0.0
      %736 = vmatprep.subr.mxu0 0.0
      %737 = vmatpush1.msra.mxu0 0.0
      %738 = vmatprep.subr.mxu0 0.0
      %739 = vmatpush1.msra.mxu0 0.0
      %740 = vmatprep.subr.mxu0 0.0
      %741 = vmatpush1.msra.mxu0 0.0
      %742 = vmatprep.subr.mxu0 0.0
      %743 = vmatpush1.msra.mxu0 0.0
      %744 = vmatprep.subr.mxu0 0.0
      %745 = vmatpush1.msra.mxu0 0.0
      %746 = vmatprep.subr.mxu0 0.0
      %747 = vmatpush1.msra.mxu0 0.0
      %748 = vmatprep.subr.mxu0 0.0
      %749 = vmatpush1.msra.mxu0 0.0
      %750 = vmatprep.subr.mxu0 0.0
      %751 = vmatpush1.msra.mxu0 0.0
      %752 = vmatprep.subr.mxu0 0.0
      %753 = vmatpush1.msra.mxu0 0.0
      %754 = vmatprep.subr.mxu0 0.0
      %755 = vmatpush1.msra.mxu0 0.0
      %756 = vmatprep.subr.mxu0 0.0
      %757 = vmatpush1.msra.mxu0 0.0
      %758 = vmatprep.subr.mxu0 0.0
      %759 = vmatpush1.msra.mxu0 0.0
      %760 = vmatprep.subr.mxu0 0.0
      %761 = vmatpush1.msra.mxu0 0.0
      %762 = vmatprep.subr.mxu0 0.0
      %763 = vmatpush1.msra.mxu0 0.0
      %764 = vmatprep.subr.mxu0 0.0
      %765 = vmatpush1.msra.mxu0 0.0
      %766 = vmatprep.subr.mxu0 0.0
      %767 = vmatpush1.msra.mxu0 0.0
      %768 = vmatprep.subr.mxu0 0.0
      %769 = vmatpush1.msra.mxu0 0.0
      %770 = vmatprep.subr.mxu0 0.0
      %771 = vmatpush1.msra.mxu0 0.0
      %772 = vmatprep.subr.mxu0 0.0
      %773 = vmatpush1.msra.mxu0 0.0
      %774 = vmatprep.subr.mxu0 0.0
      %775 = vmatpush1.msra.mxu0 0.0
      %776 = vmatprep.subr.mxu0 0.0
      %777 = vmatpush1.msra.mxu0 0.0
      %778 = vmatprep.subr.mxu0 0.0
      %779 = vmatpush1.msra.mxu0 0.0
      %780 = vmatprep.subr.mxu0 0.0
      %781 = vmatpush1.msra.mxu0 0.0
      %782 = vmatprep.subr.mxu0 0.0
      %783 = vmatpush1.msra.mxu0 0.0
      %784 = vmatprep.subr.mxu0 0.0
      %785 = vmatpush1.msra.mxu0 0.0
      %786 = vmatprep.mubr.f32.mxu0 0.0
      %787 = vmatmul.mubr.f32.gmra.mrb[0].mxu0 %v621
      %v788 = vpop.f32.mrb[0].mxu0
      %v789 = vadd.f32 %v189, %v788
      %v790 = vpop.f32.mrb[0].mxu0
      %v791 = vadd.f32 %v189, %v790
      %792 = vmatprep.mubr.f32.mxu0 0.0
      %793 = vmatmul.mubr.f32.gmra.mrb[0].mxu0 %v623
      %v794 = vpop.f32.mrb[0].mxu0
      %v795 = vadd.f32 %v194, %v794
      %v796 = vpop.f32.mrb[0].mxu0
      %v797 = vadd.f32 %v194, %v796
      %798 = vmatprep.mubr.f32.mxu0 0.0
      %799 = vmatmul.mubr.f32.gmra.mrb[0].mxu0 %v625
      %v800 = vpop.f32.mrb[0].mxu0
      %v801 = vadd.f32 %v199, %v800
      %v802 = vpop.f32.mrb[0].mxu0
      %v803 = vadd.f32 %v199, %v802
      %804 = vdwg.mxu0
      %v805 = vtanh.pop %v706
      %v806 = vtanh.pop %v708
      %v807 = vtanh.pop %v789
      %v808 = vtanh.pop %v791
      %v809 = vtanh.pop %v712
      %v810 = vtanh.pop %v714
      %v811 = vtanh.pop %v795
      %v812 = vtanh.pop %v797
      %v813 = vtanh.pop %v718
      %v814 = vtanh.pop %v720
      %v815 = vtanh.pop %v801
      %v816 = vtanh.pop %v803
      %v817 = vsel %vm423, %v202, 0
      %v819 = vsel %vm423, %v203, 0
      %v821 = vsel %vm423, %v204, 0
      %v824 = vsel %vm430, %v813, 0
      %v827 = vsel %vm430, %v814, 0
      %v830 = vsel %vm430, %v815, 0
      %v833 = vsel %vm430, %v816, 0
      %835 = vmatprep.subr.mxu0 %v806
      %836 = vmatpush1.msra.mxu0 %v805
      %837 = vmatprep.subr.mxu0 %v810
      %838 = vmatpush1.msra.mxu0 %v809
      %839 = vmatprep.subr.mxu0 %v827
      %840 = vmatpush1.msra.mxu0 %v824
      %841 = vmatprep.subr.mxu0 0.0
      %842 = vmatpush1.msra.mxu0 0.0
      %843 = vmatprep.subr.mxu0 0.0
      %844 = vmatpush1.msra.mxu0 0.0
      %845 = vmatprep.subr.mxu0 0.0
      %846 = vmatpush1.msra.mxu0 0.0
      %847 = vmatprep.subr.mxu0 0.0
      %848 = vmatpush1.msra.mxu0 0.0
      %849 = vmatprep.subr.mxu0 0.0
      %850 = vmatpush1.msra.mxu0 0.0
      %851 = vmatprep.subr.mxu0 0.0
      %852 = vmatpush1.msra.mxu0 0.0
      %853 = vmatprep.subr.mxu0 0.0
      %854 = vmatpush1.msra.mxu0 0.0
      %855 = vmatprep.subr.mxu0 0.0
      %856 = vmatpush1.msra.mxu0 0.0
      %857 = vmatprep.subr.mxu0 0.0
      %858 = vmatpush1.msra.mxu0 0.0
      %859 = vmatprep.subr.mxu0 0.0
      %860 = vmatpush1.msra.mxu0 0.0
      %861 = vmatprep.subr.mxu0 0.0
      %862 = vmatpush1.msra.mxu0 0.0
      %863 = vmatprep.subr.mxu0 0.0
      %864 = vmatpush1.msra.mxu0 0.0
      %865 = vmatprep.subr.mxu0 0.0
      %866 = vmatpush1.msra.mxu0 0.0
      %867 = vmatprep.subr.mxu0 0.0
      %868 = vmatpush1.msra.mxu0 0.0
      %869 = vmatprep.subr.mxu0 0.0
      %870 = vmatpush1.msra.mxu0 0.0
      %871 = vmatprep.subr.mxu0 0.0
      %872 = vmatpush1.msra.mxu0 0.0
      %873 = vmatprep.subr.mxu0 0.0
      %874 = vmatpush1.msra.mxu0 0.0
      %875 = vmatprep.subr.mxu0 0.0
      %876 = vmatpush1.msra.mxu0 0.0
      %877 = vmatprep.subr.mxu0 0.0
      %878 = vmatpush1.msra.mxu0 0.0
      %879 = vmatprep.subr.mxu0 0.0
      %880 = vmatpush1.msra.mxu0 0.0
      %881 = vmatprep.subr.mxu0 0.0
      %882 = vmatpush1.msra.mxu0 0.0
      %883 = vmatprep.subr.mxu0 0.0
      %884 = vmatpush1.msra.mxu0 0.0
      %885 = vmatprep.subr.mxu0 0.0
      %886 = vmatpush1.msra.mxu0 0.0
      %887 = vmatprep.subr.mxu0 0.0
      %888 = vmatpush1.msra.mxu0 0.0
      %889 = vmatprep.subr.mxu0 0.0
      %890 = vmatpush1.msra.mxu0 0.0
      %891 = vmatprep.subr.mxu0 0.0
      %892 = vmatpush1.msra.mxu0 0.0
      %893 = vmatprep.subr.mxu0 0.0
      %894 = vmatpush1.msra.mxu0 0.0
      %895 = vmatprep.subr.mxu0 0.0
      %896 = vmatpush1.msra.mxu0 0.0
      %897 = vmatprep.subr.mxu0 0.0
      %898 = vmatpush1.msra.mxu0 0.0
      %899 = vmatprep.mubr.f32.mxu0 0.0
      %900 = vmatmul.mubr.f32.gmra.mrb[0].mxu0 %v817
      %v901 = vpop.f32.mrb[0].mxu0
      %v902 = vadd.f32 %v208, %v901
      %v903 = vpop.f32.mrb[0].mxu0
      %v904 = vadd.f32 %v208, %v903
      %905 = vmatprep.mubr.f32.mxu0 0.0
      %906 = vmatmul.mubr.f32.gmra.mrb[0].mxu0 %v819
      %v907 = vpop.f32.mrb[0].mxu0
      %v908 = vadd.f32 %v213, %v907
      %v909 = vpop.f32.mrb[0].mxu0
      %v910 = vadd.f32 %v213, %v909
      %911 = vmatprep.mubr.f32.mxu0 0.0
      %912 = vmatmul.mubr.f32.gmra.mrb[0].mxu0 %v821
      %v913 = vpop.f32.mrb[0].mxu0
      %v914 = vadd.f32 %v218, %v913
      %v915 = vpop.f32.mrb[0].mxu0
      %v916 = vadd.f32 %v218, %v915
      %917 = vdwg.mxu0
      %918 = vmatprep.subr.mxu0 %v808
      %919 = vmatpush1.msra.mxu0 %v807
      %920 = vmatprep.subr.mxu0 %v812
      %921 = vmatpush1.msra.mxu0 %v811
      %922 = vmatprep.subr.mxu0 %v833
      %923 = vmatpush1.msra.mxu0 %v830
      %924 = vmatprep.subr.mxu0 0.0
      %925 = vmatpush1.msra.mxu0 0.0
      %926 = vmatprep.subr.mxu0 0.0
      %927 = vmatpush1.msra.mxu0 0.0
      %928 = vmatprep.subr.mxu0 0.0
      %929 = vmatpush1.msra.mxu0 0.0
      %930 = vmatprep.subr.mxu0 0.0
      %931 = vmatpush1.msra.mxu0 0.0
      %932 = vmatprep.subr.mxu0 0.0
      %933 = vmatpush1.msra.mxu0 0.0
      %934 = vmatprep.subr.mxu0 0.0
      %935 = vmatpush1.msra.mxu0 0.0
      %936 = vmatprep.subr.mxu0 0.0
      %937 = vmatpush1.msra.mxu0 0.0
      %938 = vmatprep.subr.mxu0 0.0
      %939 = vmatpush1.msra.mxu0 0.0
      %940 = vmatprep.subr.mxu0 0.0
      %941 = vmatpush1.msra.mxu0 0.0
      %942 = vmatprep.subr.mxu0 0.0
      %943 = vmatpush1.msra.mxu0 0.0
      %944 = vmatprep.subr.mxu0 0.0
      %945 = vmatpush1.msra.mxu0 0.0
      %946 = vmatprep.subr.mxu0 0.0
      %947 = vmatpush1.msra.mxu0 0.0
      %948 = vmatprep.subr.mxu0 0.0
      %949 = vmatpush1.msra.mxu0 0.0
      %950 = vmatprep.subr.mxu0 0.0
      %951 = vmatpush1.msra.mxu0 0.0
      %952 = vmatprep.subr.mxu0 0.0
      %953 = vmatpush1.msra.mxu0 0.0
      %954 = vmatprep.subr.mxu0 0.0
      %955 = vmatpush1.msra.mxu0 0.0
      %956 = vmatprep.subr.mxu0 0.0
      %957 = vmatpush1.msra.mxu0 0.0
      %958 = vmatprep.subr.mxu0 0.0
      %959 = vmatpush1.msra.mxu0 0.0
      %960 = vmatprep.subr.mxu0 0.0
      %961 = vmatpush1.msra.mxu0 0.0
      %962 = vmatprep.subr.mxu0 0.0
      %963 = vmatpush1.msra.mxu0 0.0
      %964 = vmatprep.subr.mxu0 0.0
      %965 = vmatpush1.msra.mxu0 0.0
      %966 = vmatprep.subr.mxu0 0.0
      %967 = vmatpush1.msra.mxu0 0.0
      %968 = vmatprep.subr.mxu0 0.0
      %969 = vmatpush1.msra.mxu0 0.0
      %970 = vmatprep.subr.mxu0 0.0
      %971 = vmatpush1.msra.mxu0 0.0
      %972 = vmatprep.subr.mxu0 0.0
      %973 = vmatpush1.msra.mxu0 0.0
      %974 = vmatprep.subr.mxu0 0.0
      %975 = vmatpush1.msra.mxu0 0.0
      %976 = vmatprep.subr.mxu0 0.0
      %977 = vmatpush1.msra.mxu0 0.0
      %978 = vmatprep.subr.mxu0 0.0
      %979 = vmatpush1.msra.mxu0 0.0
      %980 = vmatprep.subr.mxu0 0.0
      %981 = vmatpush1.msra.mxu0 0.0
      %982 = vmatprep.mubr.f32.mxu0 0.0
      %983 = vmatmul.mubr.f32.gmra.mrb[0].mxu0 %v817
      %v984 = vpop.f32.mrb[0].mxu0
      %v985 = vadd.f32 %v208, %v984
      %v986 = vpop.f32.mrb[0].mxu0
      %v987 = vadd.f32 %v208, %v986
      %988 = vmatprep.mubr.f32.mxu0 0.0
      %989 = vmatmul.mubr.f32.gmra.mrb[0].mxu0 %v819
      %v990 = vpop.f32.mrb[0].mxu0
      %v991 = vadd.f32 %v213, %v990
      %v992 = vpop.f32.mrb[0].mxu0
      %v993 = vadd.f32 %v213, %v992
      %994 = vmatprep.mubr.f32.mxu0 0.0
      %995 = vmatmul.mubr.f32.gmra.mrb[0].mxu0 %v821
      %v996 = vpop.f32.mrb[0].mxu0
      %v997 = vadd.f32 %v218, %v996
      %v998 = vpop.f32.mrb[0].mxu0
      %v999 = vadd.f32 %v218, %v998
      %1000 = vdwg.mxu0
      %v1001 = vtanh.pop %v902
      %v1002 = vtanh.pop %v904
      %v1003 = vtanh.pop %v985
      %v1004 = vtanh.pop %v987
      %v1005 = vtanh.pop %v908
      %v1006 = vtanh.pop %v910
      %v1007 = vtanh.pop %v991
      %v1008 = vtanh.pop %v993
      %v1009 = vtanh.pop %v914
      %v1010 = vtanh.pop %v916
      %v1011 = vtanh.pop %v997
      %v1012 = vtanh.pop %v999
      %v1013 = vsel %vm423, %v221, 0
      %v1015 = vsel %vm423, %v222, 0
      %v1017 = vsel %vm423, %v223, 0
      %v1020 = vsel %vm430, %v1009, 0
      %v1023 = vsel %vm430, %v1010, 0
      %v1026 = vsel %vm430, %v1011, 0
      %v1029 = vsel %vm430, %v1012, 0
      %1031 = vmatprep.subr.mxu0 %v1002
      %1032 = vmatpush1.msra.mxu0 %v1001
      %1033 = vmatprep.subr.mxu0 %v1006
      %1034 = vmatpush1.msra.mxu0 %v1005
      %1035 = vmatprep.subr.mxu0 %v1023
      %1036 = vmatpush1.msra.mxu0 %v1020
      %1037 = vmatprep.subr.mxu0 0.0
      %1038 = vmatpush1.msra.mxu0 0.0
      %1039 = vmatprep.subr.mxu0 0.0
      %1040 = vmatpush1.msra.mxu0 0.0
      %1041 = vmatprep.subr.mxu0 0.0
      %1042 = vmatpush1.msra.mxu0 0.0
      %1043 = vmatprep.subr.mxu0 0.0
      %1044 = vmatpush1.msra.mxu0 0.0
      %1045 = vmatprep.subr.mxu0 0.0
      %1046 = vmatpush1.msra.mxu0 0.0
      %1047 = vmatprep.subr.mxu0 0.0
      %1048 = vmatpush1.msra.mxu0 0.0
      %1049 = vmatprep.subr.mxu0 0.0
      %1050 = vmatpush1.msra.mxu0 0.0
      %1051 = vmatprep.subr.mxu0 0.0
      %1052 = vmatpush1.msra.mxu0 0.0
      %1053 = vmatprep.subr.mxu0 0.0
      %1054 = vmatpush1.msra.mxu0 0.0
      %1055 = vmatprep.subr.mxu0 0.0
      %1056 = vmatpush1.msra.mxu0 0.0
      %1057 = vmatprep.subr.mxu0 0.0
      %1058 = vmatpush1.msra.mxu0 0.0
      %1059 = vmatprep.subr.mxu0 0.0
      %1060 = vmatpush1.msra.mxu0 0.0
      %1061 = vmatprep.subr.mxu0 0.0
      %1062 = vmatpush1.msra.mxu0 0.0
      %1063 = vmatprep.subr.mxu0 0.0
      %1064 = vmatpush1.msra.mxu0 0.0
      %1065 = vmatprep.subr.mxu0 0.0
      %1066 = vmatpush1.msra.mxu0 0.0
      %1067 = vmatprep.subr.mxu0 0.0
      %1068 = vmatpush1.msra.mxu0 0.0
      %1069 = vmatprep.subr.mxu0 0.0
      %1070 = vmatpush1.msra.mxu0 0.0
      %1071 = vmatprep.subr.mxu0 0.0
      %1072 = vmatpush1.msra.mxu0 0.0
      %1073 = vmatprep.subr.mxu0 0.0
      %1074 = vmatpush1.msra.mxu0 0.0
      %1075 = vmatprep.subr.mxu0 0.0
      %1076 = vmatpush1.msra.mxu0 0.0
      %1077 = vmatprep.subr.mxu0 0.0
      %1078 = vmatpush1.msra.mxu0 0.0
      %1079 = vmatprep.subr.mxu0 0.0
      %1080 = vmatpush1.msra.mxu0 0.0
      %1081 = vmatprep.subr.mxu0 0.0
      %1082 = vmatpush1.msra.mxu0 0.0
      %1083 = vmatprep.subr.mxu0 0.0
      %1084 = vmatpush1.msra.mxu0 0.0
      %1085 = vmatprep.subr.mxu0 0.0
      %1086 = vmatpush1.msra.mxu0 0.0
      %1087 = vmatprep.subr.mxu0 0.0
      %1088 = vmatpush1.msra.mxu0 0.0
      %1089 = vmatprep.subr.mxu0 0.0
      %1090 = vmatpush1.msra.mxu0 0.0
      %1091 = vmatprep.subr.mxu0 0.0
      %1092 = vmatpush1.msra.mxu0 0.0
      %1093 = vmatprep.subr.mxu0 0.0
      %1094 = vmatpush1.msra.mxu0 0.0
      %1095 = vmatprep.mubr.f32.mxu0 0.0
      %1096 = vmatmul.mubr.f32.gmra.mrb[0].mxu0 %v1013
      %v1097 = vpop.f32.mrb[0].mxu0
      %v1098 = vadd.f32 %v227, %v1097
      %v1099 = vpop.f32.mrb[0].mxu0
      %v1100 = vadd.f32 %v227, %v1099
      %1101 = vmatprep.mubr.f32.mxu0 0.0
      %1102 = vmatmul.mubr.f32.gmra.mrb[0].mxu0 %v1015
      %v1103 = vpop.f32.mrb[0].mxu0
      %v1104 = vadd.f32 %v232, %v1103
      %v1105 = vpop.f32.mrb[0].mxu0
      %v1106 = vadd.f32 %v232, %v1105
      %1107 = vmatprep.mubr.f32.mxu0 0.0
      %1108 = vmatmul.mubr.f32.gmra.mrb[0].mxu0 %v1017
      %v1109 = vpop.f32.mrb[0].mxu0
      %v1110 = vadd.f32 %v237, %v1109
      %v1111 = vpop.f32.mrb[0].mxu0
      %v1112 = vadd.f32 %v237, %v1111
      %1113 = vdwg.mxu0
      %1114 = vmatprep.subr.mxu0 %v1004
      %1115 = vmatpush1.msra.mxu0 %v1003
      %1116 = vmatprep.subr.mxu0 %v1008
      %1117 = vmatpush1.msra.mxu0 %v1007
      %1118 = vmatprep.subr.mxu0 %v1029
      %1119 = vmatpush1.msra.mxu0 %v1026
      %1120 = vmatprep.subr.mxu0 0.0
      %1121 = vmatpush1.msra.mxu0 0.0
      %1122 = vmatprep.subr.mxu0 0.0
      %1123 = vmatpush1.msra.mxu0 0.0
      %1124 = vmatprep.subr.mxu0 0.0
      %1125 = vmatpush1.msra.mxu0 0.0
      %1126 = vmatprep.subr.mxu0 0.0
      %1127 = vmatpush1.msra.mxu0 0.0
      %1128 = vmatprep.subr.mxu0 0.0
      %1129 = vmatpush1.msra.mxu0 0.0
      %1130 = vmatprep.subr.mxu0 0.0
      %1131 = vmatpush1.msra.mxu0 0.0
      %1132 = vmatprep.subr.mxu0 0.0
      %1133 = vmatpush1.msra.mxu0 0.0
      %1134 = vmatprep.subr.mxu0 0.0
      %1135 = vmatpush1.msra.mxu0 0.0
      %1136 = vmatprep.subr.mxu0 0.0
      %1137 = vmatpush1.msra.mxu0 0.0
      %1138 = vmatprep.subr.mxu0 0.0
      %1139 = vmatpush1.msra.mxu0 0.0
      %1140 = vmatprep.subr.mxu0 0.0
      %1141 = vmatpush1.msra.mxu0 0.0
      %1142 = vmatprep.subr.mxu0 0.0
      %1143 = vmatpush1.msra.mxu0 0.0
      %1144 = vmatprep.subr.mxu0 0.0
      %1145 = vmatpush1.msra.mxu0 0.0
      %1146 = vmatprep.subr.mxu0 0.0
      %1147 = vmatpush1.msra.mxu0 0.0
      %1148 = vmatprep.subr.mxu0 0.0
      %1149 = vmatpush1.msra.mxu0 0.0
      %1150 = vmatprep.subr.mxu0 0.0
      %1151 = vmatpush1.msra.mxu0 0.0
      %1152 = vmatprep.subr.mxu0 0.0
      %1153 = vmatpush1.msra.mxu0 0.0
      %1154 = vmatprep.subr.mxu0 0.0
      %1155 = vmatpush1.msra.mxu0 0.0
      %1156 = vmatprep.subr.mxu0 0.0
      %1157 = vmatpush1.msra.mxu0 0.0
      %1158 = vmatprep.subr.mxu0 0.0
      %1159 = vmatpush1.msra.mxu0 0.0
      %1160 = vmatprep.subr.mxu0 0.0
      %1161 = vmatpush1.msra.mxu0 0.0
      %1162 = vmatprep.subr.mxu0 0.0
      %1163 = vmatpush1.msra.mxu0 0.0
      %1164 = vmatprep.subr.mxu0 0.0
      %1165 = vmatpush1.msra.mxu0 0.0
      %1166 = vmatprep.subr.mxu0 0.0
      %1167 = vmatpush1.msra.mxu0 0.0
      %1168 = vmatprep.subr.mxu0 0.0
      %1169 = vmatpush1.msra.mxu0 0.0
      %1170 = vmatprep.subr.mxu0 0.0
      %1171 = vmatpush1.msra.mxu0 0.0
      %1172 = vmatprep.subr.mxu0 0.0
      %1173 = vmatpush1.msra.mxu0 0.0
      %1174 = vmatprep.subr.mxu0 0.0
      %1175 = vmatpush1.msra.mxu0 0.0
      %1176 = vmatprep.subr.mxu0 0.0
      %1177 = vmatpush1.msra.mxu0 0.0
      %1178 = vmatprep.mubr.f32.mxu0 0.0
      %1179 = vmatmul.mubr.f32.gmra.mrb[0].mxu0 %v1013
      %v1180 = vpop.f32.mrb[0].mxu0
      %v1181 = vadd.f32 %v227, %v1180
      %v1182 = vpop.f32.mrb[0].mxu0
      %v1183 = vadd.f32 %v227, %v1182
      %1184 = vmatprep.mubr.f32.mxu0 0.0
      %1185 = vmatmul.mubr.f32.gmra.mrb[0].mxu0 %v1015
      %v1186 = vpop.f32.mrb[0].mxu0
      %v1187 = vadd.f32 %v232, %v1186
      %v1188 = vpop.f32.mrb[0].mxu0
      %v1189 = vadd.f32 %v232, %v1188
      %1190 = vmatprep.mubr.f32.mxu0 0.0
      %1191 = vmatmul.mubr.f32.gmra.mrb[0].mxu0 %v1017
      %v1192 = vpop.f32.mrb[0].mxu0
      %v1193 = vadd.f32 %v237, %v1192
      %v1194 = vpop.f32.mrb[0].mxu0
      %v1195 = vadd.f32 %v237, %v1194
      %1196 = vdwg.mxu0
      %v1197 = vtanh.pop %v1098
      %v1198 = vtanh.pop %v1100
      %v1199 = vtanh.pop %v1181
      %v1200 = vtanh.pop %v1183
      %v1201 = vtanh.pop %v1104
      %v1202 = vtanh.pop %v1106
      %v1203 = vtanh.pop %v1187
      %v1204 = vtanh.pop %v1189
      %v1205 = vtanh.pop %v1110
      %v1206 = vtanh.pop %v1112
      %v1207 = vtanh.pop %v1193
      %v1208 = vtanh.pop %v1195
      %v1209 = vsel %vm423, %v240, 0
      %v1211 = vsel %vm423, %v241, 0
      %v1213 = vsel %vm423, %v242, 0
      %v1216 = vsel %vm430, %v1205, 0
      %v1219 = vsel %vm430, %v1206, 0
      %v1222 = vsel %vm430, %v1207, 0
      %v1225 = vsel %vm430, %v1208, 0
      %1227 = vmatprep.subr.mxu0 %v1198
      %1228 = vmatpush1.msra.mxu0 %v1197
      %1229 = vmatprep.subr.mxu0 %v1202
      %1230 = vmatpush1.msra.mxu0 %v1201
      %1231 = vmatprep.subr.mxu0 %v1219
      %1232 = vmatpush1.msra.mxu0 %v1216
      %1233 = vmatprep.subr.mxu0 0.0
      %1234 = vmatpush1.msra.mxu0 0.0
      %1235 = vmatprep.subr.mxu0 0.0
      %1236 = vmatpush1.msra.mxu0 0.0
      %1237 = vmatprep.subr.mxu0 0.0
      %1238 = vmatpush1.msra.mxu0 0.0
      %1239 = vmatprep.subr.mxu0 0.0
      %1240 = vmatpush1.msra.mxu0 0.0
      %1241 = vmatprep.subr.mxu0 0.0
      %1242 = vmatpush1.msra.mxu0 0.0
      %1243 = vmatprep.subr.mxu0 0.0
      %1244 = vmatpush1.msra.mxu0 0.0
      %1245 = vmatprep.subr.mxu0 0.0
      %1246 = vmatpush1.msra.mxu0 0.0
      %1247 = vmatprep.subr.mxu0 0.0
      %1248 = vmatpush1.msra.mxu0 0.0
      %1249 = vmatprep.subr.mxu0 0.0
      %1250 = vmatpush1.msra.mxu0 0.0
      %1251 = vmatprep.subr.mxu0 0.0
      %1252 = vmatpush1.msra.mxu0 0.0
      %1253 = vmatprep.subr.mxu0 0.0
      %1254 = vmatpush1.msra.mxu0 0.0
      %1255 = vmatprep.subr.mxu0 0.0
      %1256 = vmatpush1.msra.mxu0 0.0
      %1257 = vmatprep.subr.mxu0 0.0
      %1258 = vmatpush1.msra.mxu0 0.0
      %1259 = vmatprep.subr.mxu0 0.0
      %1260 = vmatpush1.msra.mxu0 0.0
      %1261 = vmatprep.subr.mxu0 0.0
      %1262 = vmatpush1.msra.mxu0 0.0
      %1263 = vmatprep.subr.mxu0 0.0
      %1264 = vmatpush1.msra.mxu0 0.0
      %1265 = vmatprep.subr.mxu0 0.0
      %1266 = vmatpush1.msra.mxu0 0.0
      %1267 = vmatprep.subr.mxu0 0.0
      %1268 = vmatpush1.msra.mxu0 0.0
      %1269 = vmatprep.subr.mxu0 0.0
      %1270 = vmatpush1.msra.mxu0 0.0
      %1271 = vmatprep.subr.mxu0 0.0
      %1272 = vmatpush1.msra.mxu0 0.0
      %1273 = vmatprep.subr.mxu0 0.0
      %1274 = vmatpush1.msra.mxu0 0.0
      %1275 = vmatprep.subr.mxu0 0.0
      %1276 = vmatpush1.msra.mxu0 0.0
      %1277 = vmatprep.subr.mxu0 0.0
      %1278 = vmatpush1.msra.mxu0 0.0
      %1279 = vmatprep.subr.mxu0 0.0
      %1280 = vmatpush1.msra.mxu0 0.0
      %1281 = vmatprep.subr.mxu0 0.0
      %1282 = vmatpush1.msra.mxu0 0.0
      %1283 = vmatprep.subr.mxu0 0.0
      %1284 = vmatpush1.msra.mxu0 0.0
      %1285 = vmatprep.subr.mxu0 0.0
      %1286 = vmatpush1.msra.mxu0 0.0
      %1287 = vmatprep.subr.mxu0 0.0
      %1288 = vmatpush1.msra.mxu0 0.0
      %1289 = vmatprep.subr.mxu0 0.0
      %1290 = vmatpush1.msra.mxu0 0.0
      %1291 = vmatprep.mubr.f32.mxu0 0.0
      %1292 = vmatmul.mubr.f32.gmra.mrb[0].mxu0 %v1209
      %v1293 = vpop.f32.mrb[0].mxu0
      %v1294 = vadd.f32 %v246, %v1293
      %v1295 = vpop.f32.mrb[0].mxu0
      %v1296 = vadd.f32 %v246, %v1295
      %1297 = vmatprep.mubr.f32.mxu0 0.0
      %1298 = vmatmul.mubr.f32.gmra.mrb[0].mxu0 %v1211
      %v1299 = vpop.f32.mrb[0].mxu0
      %v1300 = vadd.f32 %v251, %v1299
      %v1301 = vpop.f32.mrb[0].mxu0
      %v1302 = vadd.f32 %v251, %v1301
      %1303 = vmatprep.mubr.f32.mxu0 0.0
      %1304 = vmatmul.mubr.f32.gmra.mrb[0].mxu0 %v1213
      %v1305 = vpop.f32.mrb[0].mxu0
      %v1306 = vadd.f32 %v256, %v1305
      %v1307 = vpop.f32.mrb[0].mxu0
      %v1308 = vadd.f32 %v256, %v1307
      %1309 = vdwg.mxu0
      %1310 = vmatprep.subr.mxu0 %v1200
      %1311 = vmatpush1.msra.mxu0 %v1199
      %1312 = vmatprep.subr.mxu0 %v1204
      %1313 = vmatpush1.msra.mxu0 %v1203
      %1314 = vmatprep.subr.mxu0 %v1225
      %1315 = vmatpush1.msra.mxu0 %v1222
      %1316 = vmatprep.subr.mxu0 0.0
      %1317 = vmatpush1.msra.mxu0 0.0
      %1318 = vmatprep.subr.mxu0 0.0
      %1319 = vmatpush1.msra.mxu0 0.0
      %1320 = vmatprep.subr.mxu0 0.0
      %1321 = vmatpush1.msra.mxu0 0.0
      %1322 = vmatprep.subr.mxu0 0.0
      %1323 = vmatpush1.msra.mxu0 0.0
      %1324 = vmatprep.subr.mxu0 0.0
      %1325 = vmatpush1.msra.mxu0 0.0
      %1326 = vmatprep.subr.mxu0 0.0
      %1327 = vmatpush1.msra.mxu0 0.0
      %1328 = vmatprep.subr.mxu0 0.0
      %1329 = vmatpush1.msra.mxu0 0.0
      %1330 = vmatprep.subr.mxu0 0.0
      %1331 = vmatpush1.msra.mxu0 0.0
      %1332 = vmatprep.subr.mxu0 0.0
      %1333 = vmatpush1.msra.mxu0 0.0
      %1334 = vmatprep.subr.mxu0 0.0
      %1335 = vmatpush1.msra.mxu0 0.0
      %1336 = vmatprep.subr.mxu0 0.0
      %1337 = vmatpush1.msra.mxu0 0.0
      %1338 = vmatprep.subr.mxu0 0.0
      %1339 = vmatpush1.msra.mxu0 0.0
      %1340 = vmatprep.subr.mxu0 0.0
      %1341 = vmatpush1.msra.mxu0 0.0
      %1342 = vmatprep.subr.mxu0 0.0
      %1343 = vmatpush1.msra.mxu0 0.0
      %1344 = vmatprep.subr.mxu0 0.0
      %1345 = vmatpush1.msra.mxu0 0.0
      %1346 = vmatprep.subr.mxu0 0.0
      %1347 = vmatpush1.msra.mxu0 0.0
      %1348 = vmatprep.subr.mxu0 0.0
      %1349 = vmatpush1.msra.mxu0 0.0
      %1350 = vmatprep.subr.mxu0 0.0
      %1351 = vmatpush1.msra.mxu0 0.0
      %1352 = vmatprep.subr.mxu0 0.0
      %1353 = vmatpush1.msra.mxu0 0.0
      %1354 = vmatprep.subr.mxu0 0.0
      %1355 = vmatpush1.msra.mxu0 0.0
      %1356 = vmatprep.subr.mxu0 0.0
      %1357 = vmatpush1.msra.mxu0 0.0
      %1358 = vmatprep.subr.mxu0 0.0
      %1359 = vmatpush1.msra.mxu0 0.0
      %1360 = vmatprep.subr.mxu0 0.0
      %1361 = vmatpush1.msra.mxu0 0.0
      %1362 = vmatprep.subr.mxu0 0.0
      %1363 = vmatpush1.msra.mxu0 0.0
      %1364 = vmatprep.subr.mxu0 0.0
      %1365 = vmatpush1.msra.mxu0 0.0
      %1366 = vmatprep.subr.mxu0 0.0
      %1367 = vmatpush1.msra.mxu0 0.0
      %1368 = vmatprep.subr.mxu0 0.0
      %1369 = vmatpush1.msra.mxu0 0.0
      %1370 = vmatprep.subr.mxu0 0.0
      %1371 = vmatpush1.msra.mxu0 0.0
      %1372 = vmatprep.subr.mxu0 0.0
      %1373 = vmatpush1.msra.mxu0 0.0
      %1374 = vmatprep.mubr.f32.mxu0 0.0
      %1375 = vmatmul.mubr.f32.gmra.mrb[0].mxu0 %v1209
      %v1376 = vpop.f32.mrb[0].mxu0
      %v1377 = vadd.f32 %v246, %v1376
      %v1378 = vpop.f32.mrb[0].mxu0
      %v1379 = vadd.f32 %v246, %v1378
      %1380 = vmatprep.mubr.f32.mxu0 0.0
      %1381 = vmatmul.mubr.f32.gmra.mrb[0].mxu0 %v1211
      %v1382 = vpop.f32.mrb[0].mxu0
      %v1383 = vadd.f32 %v251, %v1382
      %v1384 = vpop.f32.mrb[0].mxu0
      %v1385 = vadd.f32 %v251, %v1384
      %1386 = vmatprep.mubr.f32.mxu0 0.0
      %1387 = vmatmul.mubr.f32.gmra.mrb[0].mxu0 %v1213
      %v1388 = vpop.f32.mrb[0].mxu0
      %v1389 = vadd.f32 %v256, %v1388
      %v1390 = vpop.f32.mrb[0].mxu0
      %v1391 = vadd.f32 %v256, %v1390
      %1392 = vdwg.mxu0
      %v1393 = vtanh.pop %v1294
      %v1394 = vtanh.pop %v1296
      %v1395 = vtanh.pop %v1377
      %v1396 = vtanh.pop %v1379
      %v1397 = vtanh.pop %v1300
      %v1398 = vtanh.pop %v1302
      %v1399 = vtanh.pop %v1383
      %v1400 = vtanh.pop %v1385
      %v1401 = vtanh.pop %v1306
      %v1402 = vtanh.pop %v1308
      %v1403 = vtanh.pop %v1389
      %v1404 = vtanh.pop %v1391
      %v1405 = vsel %vm423, %v259, 0
      %v1408 = vsel %vm430, %v1401, 0
      %v1411 = vsel %vm430, %v1402, 0
      %v1414 = vsel %vm430, %v1403, 0
      %v1417 = vsel %vm430, %v1404, 0
      %1419 = vmatprep.subr.mxu0 %v1394
      %1420 = vmatpush1.msra.mxu0 %v1393
      %1421 = vmatprep.subr.mxu0 %v1398
      %1422 = vmatpush1.msra.mxu0 %v1397
      %1423 = vmatprep.subr.mxu0 %v1411
      %1424 = vmatpush1.msra.mxu0 %v1408
      %1425 = vmatprep.subr.mxu0 0.0
      %1426 = vmatpush1.msra.mxu0 0.0
      %1427 = vmatprep.subr.mxu0 0.0
      %1428 = vmatpush1.msra.mxu0 0.0
      %1429 = vmatprep.subr.mxu0 0.0
      %1430 = vmatpush1.msra.mxu0 0.0
      %1431 = vmatprep.subr.mxu0 0.0
      %1432 = vmatpush1.msra.mxu0 0.0
      %1433 = vmatprep.subr.mxu0 0.0
      %1434 = vmatpush1.msra.mxu0 0.0
      %1435 = vmatprep.subr.mxu0 0.0
      %1436 = vmatpush1.msra.mxu0 0.0
      %1437 = vmatprep.subr.mxu0 0.0
      %1438 = vmatpush1.msra.mxu0 0.0
      %1439 = vmatprep.subr.mxu0 0.0
      %1440 = vmatpush1.msra.mxu0 0.0
      %1441 = vmatprep.subr.mxu0 0.0
      %1442 = vmatpush1.msra.mxu0 0.0
      %1443 = vmatprep.subr.mxu0 0.0
      %1444 = vmatpush1.msra.mxu0 0.0
      %1445 = vmatprep.subr.mxu0 0.0
      %1446 = vmatpush1.msra.mxu0 0.0
      %1447 = vmatprep.subr.mxu0 0.0
      %1448 = vmatpush1.msra.mxu0 0.0
      %1449 = vmatprep.subr.mxu0 0.0
      %1450 = vmatpush1.msra.mxu0 0.0
      %1451 = vmatprep.subr.mxu0 0.0
      %1452 = vmatpush1.msra.mxu0 0.0
      %1453 = vmatprep.subr.mxu0 0.0
      %1454 = vmatpush1.msra.mxu0 0.0
      %1455 = vmatprep.subr.mxu0 0.0
      %1456 = vmatpush1.msra.mxu0 0.0
      %1457 = vmatprep.subr.mxu0 0.0
      %1458 = vmatpush1.msra.mxu0 0.0
      %1459 = vmatprep.subr.mxu0 0.0
      %1460 = vmatpush1.msra.mxu0 0.0
      %1461 = vmatprep.subr.mxu0 0.0
      %1462 = vmatpush1.msra.mxu0 0.0
      %1463 = vmatprep.subr.mxu0 0.0
      %1464 = vmatpush1.msra.mxu0 0.0
      %1465 = vmatprep.subr.mxu0 0.0
      %1466 = vmatpush1.msra.mxu0 0.0
      %1467 = vmatprep.subr.mxu0 0.0
      %1468 = vmatpush1.msra.mxu0 0.0
      %1469 = vmatprep.subr.mxu0 0.0
      %1470 = vmatpush1.msra.mxu0 0.0
      %1471 = vmatprep.subr.mxu0 0.0
      %1472 = vmatpush1.msra.mxu0 0.0
      %1473 = vmatprep.subr.mxu0 0.0
      %1474 = vmatpush1.msra.mxu0 0.0
      %1475 = vmatprep.subr.mxu0 0.0
      %1476 = vmatpush1.msra.mxu0 0.0
      %1477 = vmatprep.subr.mxu0 0.0
      %1478 = vmatpush1.msra.mxu0 0.0
      %1479 = vmatprep.subr.mxu0 0.0
      %1480 = vmatpush1.msra.mxu0 0.0
      %1481 = vmatprep.subr.mxu0 0.0
      %1482 = vmatpush1.msra.mxu0 0.0
      %1483 = vmatprep.mubr.f32.mxu0 0.0
      %1484 = vmatmul.mubr.f32.gmra.mrb[0].mxu0 %v1405
      %v1485 = vpop.f32.mrb[0].mxu0
      %v1486 = vadd.f32 %v263, %v1485
      %v1487 = vpop.f32.mrb[0].mxu0
      %v1488 = vadd.f32 %v263, %v1487
      %1489 = vdwg.mxu0
      %1490 = vmatprep.subr.mxu0 %v1396
      %1491 = vmatpush1.msra.mxu0 %v1395
      %1492 = vmatprep.subr.mxu0 %v1400
      %1493 = vmatpush1.msra.mxu0 %v1399
      %1494 = vmatprep.subr.mxu0 %v1417
      %1495 = vmatpush1.msra.mxu0 %v1414
      %1496 = vmatprep.subr.mxu0 0.0
      %1497 = vmatpush1.msra.mxu0 0.0
      %1498 = vmatprep.subr.mxu0 0.0
      %1499 = vmatpush1.msra.mxu0 0.0
      %1500 = vmatprep.subr.mxu0 0.0
      %1501 = vmatpush1.msra.mxu0 0.0
      %1502 = vmatprep.subr.mxu0 0.0
      %1503 = vmatpush1.msra.mxu0 0.0
      %1504 = vmatprep.subr.mxu0 0.0
      %1505 = vmatpush1.msra.mxu0 0.0
      %1506 = vmatprep.subr.mxu0 0.0
      %1507 = vmatpush1.msra.mxu0 0.0
      %1508 = vmatprep.subr.mxu0 0.0
      %1509 = vmatpush1.msra.mxu0 0.0
      %1510 = vmatprep.subr.mxu0 0.0
      %1511 = vmatpush1.msra.mxu0 0.0
      %1512 = vmatprep.subr.mxu0 0.0
      %1513 = vmatpush1.msra.mxu0 0.0
      %1514 = vmatprep.subr.mxu0 0.0
      %1515 = vmatpush1.msra.mxu0 0.0
      %1516 = vmatprep.subr.mxu0 0.0
      %1517 = vmatpush1.msra.mxu0 0.0
      %1518 = vmatprep.subr.mxu0 0.0
      %1519 = vmatpush1.msra.mxu0 0.0
      %1520 = vmatprep.subr.mxu0 0.0
      %1521 = vmatpush1.msra.mxu0 0.0
      %1522 = vmatprep.subr.mxu0 0.0
      %1523 = vmatpush1.msra.mxu0 0.0
      %1524 = vmatprep.subr.mxu0 0.0
      %1525 = vmatpush1.msra.mxu0 0.0
      %1526 = vmatprep.subr.mxu0 0.0
      %1527 = vmatpush1.msra.mxu0 0.0
      %1528 = vmatprep.subr.mxu0 0.0
      %1529 = vmatpush1.msra.mxu0 0.0
      %1530 = vmatprep.subr.mxu0 0.0
      %1531 = vmatpush1.msra.mxu0 0.0
      %1532 = vmatprep.subr.mxu0 0.0
      %1533 = vmatpush1.msra.mxu0 0.0
      %1534 = vmatprep.subr.mxu0 0.0
      %1535 = vmatpush1.msra.mxu0 0.0
      %1536 = vmatprep.subr.mxu0 0.0
      %1537 = vmatpush1.msra.mxu0 0.0
      %1538 = vmatprep.subr.mxu0 0.0
      %1539 = vmatpush1.msra.mxu0 0.0
      %1540 = vmatprep.subr.mxu0 0.0
      %1541 = vmatpush1.msra.mxu0 0.0
      %1542 = vmatprep.subr.mxu0 0.0
      %1543 = vmatpush1.msra.mxu0 0.0
      %1544 = vmatprep.subr.mxu0 0.0
      %1545 = vmatpush1.msra.mxu0 0.0
      %1546 = vmatprep.subr.mxu0 0.0
      %1547 = vmatpush1.msra.mxu0 0.0
      %1548 = vmatprep.subr.mxu0 0.0
      %1549 = vmatpush1.msra.mxu0 0.0
      %1550 = vmatprep.subr.mxu0 0.0
      %1551 = vmatpush1.msra.mxu0 0.0
      %1552 = vmatprep.subr.mxu0 0.0
      %1553 = vmatpush1.msra.mxu0 0.0
      %1554 = vmatprep.mubr.f32.mxu0 0.0
      %1555 = vmatmul.mubr.f32.gmra.mrb[0].mxu0 %v1405
      %v1556 = vpop.f32.mrb[0].mxu0
      %v1557 = vadd.f32 %v263, %v1556
      %v1558 = vpop.f32.mrb[0].mxu0
      %v1559 = vadd.f32 %v263, %v1558
      %1560 = vdwg.mxu0
      %v1565 = vcombine.low %v1486, %v1488
      %v1566 = vcombine.low %v1557, %v1559
      %v1568 = vunpack.c.l.s4 1966171168
      %v1569 = vunpack.c.0.s8 %v1568
      %v1570 = vlaneseq
      %v1571 = vshrl.u32 %v1570, 7
      %v1572 = vsub.s32 %v1569, %v1571
      %v1573 = vrot.slane %v1565, %v1572
      %v1575 = vunpack.c.l.s4 1966171168
      %v1576 = vunpack.c.0.s8 %v1575
      %v1577 = vlaneseq
      %v1578 = vshrl.u32 %v1577, 7
      %v1579 = vsub.s32 %v1576, %v1578
      %v1580 = vrot.slane %v1566, %v1579
      %v1581 = vcombine.low %v1573, %v1580
      %v1583 = vunpack.c.l.s4 1966171168
      %v1584 = vunpack.c.0.s8 %v1583
      %v1585 = vlaneseq
      %v1586 = vshrl.u32 %v1585, 7
      %v1587 = vsub.s32 %v1584, %v1586
      %v1588 = vrot.slane %v1581, %v1587
      %v1590 = vlaneseq
      %vm1591 = vcmp.ge.s32.totalorder %v1590, 0
      %vm1592 = vcmp.lt.s32.totalorder %v1590, 512
      %vm1593 = vmand %vm1591, %vm1592
      %1594 = vst.msk [vmem:[%s143] sm:$0xf] %vm1593, %v1588
      %s1595 = smul.u32 4, %s13
      %p1596 = scmp.lt.s32.totalorder %s1595, 7
      %s1597 = scalar_select %p1596, %s1595, 7
      %s1598 = scalar_lea.vmem %s2, %s1597
      // Predicated region
      $region29: #{_dnn_forward.1} parent=27 // pred_check
        %p1599 = pneg %p78
      $region30: #{_dnn_forward.1} parent=27 // pred_check_branch
        %1601 = sbr.rel (%p1599) target = $region32
      $region31: #{_dnn_forward.1} parent=27 // pred_region
        %s1602 = smul.u32 4, %s13
      $region32: #{_dnn_forward.1} parent=27 // pred_fallthru
        _
    $region28: #{_dnn_forward.1} parent=5 // pred_fallthru
      _
    %p1603 = scmp.le.s32.totalorder 2, %s8
    // Predicated region
    $region33: #{_dnn_forward.1} parent=5 // pred_check
      %p1604 = pneg %p1603
    $region34: #{_dnn_forward.1} parent=5 // pred_check_branch
      %1606 = sbr.rel (%p1604) target = $region36
    $region35: #{_dnn_forward.1} parent=5 // pred_region
      %s1607 = ssub.s32 %s8, 2
      // Predicated region
      $region37: #{_dnn_forward.1} parent=35 // pred_check
        %p1608 = pneg %p84
      $region38: #{_dnn_forward.1} parent=35 // pred_check_branch
        %1610 = sbr.rel (%p1608) target = $region40
      $region39: #{_dnn_forward.1} parent=35 // pred_region
        %s1611 = smul.u32 4, %s14
        %p1612 = scmp.lt.s32.totalorder %s1611, 7
        %s1613 = scalar_select %p1612, %s1611, 7
        %s1614 = scalar_lea.vmem %s2, %s1613
      $region40: #{_dnn_forward.1} parent=35 // pred_fallthru
        _
    $region36: #{_dnn_forward.1} parent=5 // pred_fallthru
      _
  $region6: #{_dnn_forward.1} parent=0 // loop_footer
    %s12 = sadd.s32 1, %s8
  $region7: #{_dnn_forward.1} parent=0 // loop_footer_branch
    %7 = sbr.rel target = $region3
  $region8: #{_dnn_forward.1} parent=0 // loop_exit
    _

</llo_original>
